<compile_context>
chip_gen: v6e
topology: v6e:2x2x1
jax: 0.10.0
libtpu: 0.0.40
codegen_flags: <defaults>
</compile_context>

<pallas_src>
import jax
import jax.numpy as jnp
from jax import lax
from jax.experimental import pallas as pl
from jax.experimental.pallas import tpu as pltpu

EPS = 1e-5
_VMEM_LIMIT = 32 * 1024 * 1024          # explicit scoped-VMEM ceiling (safe on v5e/v6e/v7x)


def _round_up(x, m):
    return ((x + m - 1) // m) * m


# ----------------------------------------------------------------------------- kernels
def _conv3x3_stats_kernel(xb_ref, w_ref, y_ref, ssum_ref, ssq_ref):
    # xb_ref : (TH+2, W, 3*Cin)  halo'd row block; kw taps pre-fused along channels
    # w_ref  : (3, 3*Cin, Cpad)  weights with (kw, ci) flattened into K, lanes zero-padded
    # y_ref  : (TH*W, Cpad)      raw conv output tile (lane-dense; no bias: BN cancels it)
    # ssum_ref / ssq_ref : (1, Cpad) per-block partial BN statistics
    thp, width, k = xb_ref.shape
    th = thp - 2

    # Three MXU matmuls with K = 3*Cin (one per kh tap), f32 accumulation.
    acc = jnp.dot(xb_ref[0:th].reshape(th * width, k), w_ref[0],
                  preferred_element_type=jnp.float32)
    acc = acc + jnp.dot(xb_ref[1:th + 1].reshape(th * width, k), w_ref[1],
                        preferred_element_type=jnp.float32)
    acc = acc + jnp.dot(xb_ref[2:th + 2].reshape(th * width, k), w_ref[2],
                        preferred_element_type=jnp.float32)

    y_ref[...] = acc                                           # unmasked full-lane store
    ssum_ref[...] = jnp.sum(acc, axis=0, keepdims=True)        # partial BN stats
    ssq_ref[...] = jnp.sum(acc * acc, axis=0, keepdims=True)


def _bn_relu_kernel(y_ref, scale_ref, shift_ref, o_ref):
    # Folded BatchNorm + ReLU: out = relu(y * scale + shift), all lane-dense.
    o_ref[...] = jnp.maximum(y_ref[...] * scale_ref[...] + shift_ref[...], 0.0)


# ----------------------------------------------------------------------------- call builders
def _conv3x3_blocks(xblk, wmat):
    """xblk: (NB, TH+2, W, 3*Cin), wmat: (3, 3*Cin, Cpad) -> (y, sum, sumsq)."""
    nb_total, thp, width, k = xblk.shape
    th = thp - 2
    _, k2, cpad = wmat.shape
    assert k2 == k
    m = th * width

    flops = 2 * 3 * nb_total * m * k * cpad
    bytes_accessed = 4 * (xblk.size + wmat.size + nb_total * m * cpad + 2 * nb_total * cpad)

    return pl.pallas_call(
        _conv3x3_stats_kernel,
        out_shape=(jax.ShapeDtypeStruct((nb_total, m, cpad), jnp.float32),
                   jax.ShapeDtypeStruct((nb_total, 1, cpad), jnp.float32),
                   jax.ShapeDtypeStruct((nb_total, 1, cpad), jnp.float32)),
        grid=(nb_total,),
        in_specs=[pl.BlockSpec((None, thp, width, k), lambda i: (i, 0, 0, 0)),
                  pl.BlockSpec((3, k, cpad), lambda i: (0, 0, 0))],
        out_specs=(pl.BlockSpec((None, m, cpad), lambda i: (i, 0, 0)),
                   pl.BlockSpec((None, 1, cpad), lambda i: (i, 0, 0)),
                   pl.BlockSpec((None, 1, cpad), lambda i: (i, 0, 0))),
        compiler_params=pltpu.CompilerParams(
            dimension_semantics=("parallel",),
            vmem_limit_bytes=_VMEM_LIMIT),
        cost_estimate=pl.CostEstimate(flops=int(flops), transcendentals=0,
                                      bytes_accessed=int(bytes_accessed)),
    )(xblk, wmat)


def _bn_relu(y2d, scale, shift):
    """y2d: (rows, Cpad); scale/shift: (1, Cpad) -> relu(y*scale + shift)."""
    rows, cpad = y2d.shape
    tr = 128 if rows % 128 == 0 else (8 if rows % 8 == 0 else rows)
    return pl.pallas_call(
        _bn_relu_kernel,
        out_shape=jax.ShapeDtypeStruct((rows, cpad), jnp.float32),
        grid=(rows // tr,),
        in_specs=[pl.BlockSpec((tr, cpad), lambda i: (i, 0)),
                  pl.BlockSpec((1, cpad), lambda i: (0, 0)),
                  pl.BlockSpec((1, cpad), lambda i: (0, 0))],
        out_specs=pl.BlockSpec((tr, cpad), lambda i: (i, 0)),
        compiler_params=pltpu.CompilerParams(
            dimension_semantics=("parallel",),
            vmem_limit_bytes=_VMEM_LIMIT),
        cost_estimate=pl.CostEstimate(flops=int(2 * rows * cpad), transcendentals=0,
                                      bytes_accessed=int(4 * (2 * rows * cpad + 2 * cpad))),
    )(y2d, scale, shift)


# ----------------------------------------------------------------------------- wrapper plumbing
def _fuse_kw_taps(xpad):
    """(N, H+2, W+2, C) spatially padded -> (N, H+2, W, 3*C): im2col along width."""
    width = xpad.shape[2] - 2
    return jnp.concatenate([xpad[:, :, kw:kw + width, :] for kw in range(3)], axis=-1)


def _overlap_row_blocks(x, row_tile):
    """(N, H+2, ...) -> (N*nb, row_tile+2, ...) halo'd row blocks (wrapper-side gather)."""
    n, hp = x.shape[0], x.shape[1]
    nb = (hp - 2) // row_tile
    idx = jnp.arange(nb)[:, None] * row_tile + jnp.arange(row_tile + 2)[None, :]
    blocks = x[:, idx]                                   # (N, nb, row_tile+2, ...)
    return blocks.reshape((n * nb, row_tile + 2) + x.shape[2:])


def _pack_weight(w_hwio, cpad):
    """(3, 3, Cin, Cout) HWIO -> (3, 3*Cin, Cpad) with (kw, ci) flattened into K."""
    kh, kw, cin, cout = w_hwio.shape
    wm = w_hwio.astype(jnp.float32).reshape(kh, kw * cin, cout)
    return jnp.pad(wm, ((0, 0), (0, 0), (0, cpad - cout)))


def _bn_scale_shift(ssum, ssq, gamma, beta, count, cpad):
    """Fold batch statistics + BN affine into one per-channel scale/shift."""
    mean = jnp.sum(ssum, axis=(0, 1)) / count
    var = jnp.sum(ssq, axis=(0, 1)) / count - mean * mean       # biased var (training BN)
    g = jnp.pad(gamma.astype(jnp.float32), (0, cpad - gamma.shape[0]))
    b = jnp.pad(beta.astype(jnp.float32), (0, cpad - beta.shape[0]))
    scale = g * lax.rsqrt(var + EPS)
    shift = b - mean * scale
    return scale.reshape(1, cpad), shift.reshape(1, cpad)


# ----------------------------------------------------------------------------- public API
def init_params(key, in_channels, out_channels, mid_channels=None):
    if mid_channels is None:
        mid_channels = out_channels
    k1, k2, k3, k4 = jax.random.split(key, 4)
    w1 = jax.random.normal(k1, (3, 3, in_channels, mid_channels), jnp.float32) * 0.1
    b1 = jax.random.normal(k2, (mid_channels,), jnp.float32) * 0.1
    g1 = jnp.ones((mid_channels,), jnp.float32)     # BN weight init (PyTorch: ones)
    be1 = jnp.zeros((mid_channels,), jnp.float32)   # BN bias init (PyTorch: zeros)
    w2 = jax.random.normal(k3, (3, 3, mid_channels, out_channels), jnp.float32) * 0.1
    b2 = jax.random.normal(k4, (out_channels,), jnp.float32) * 0.1
    g2 = jnp.ones((out_channels,), jnp.float32)
    be2 = jnp.zeros((out_channels,), jnp.float32)
    return (w1, b1, g1, be1, w2, b2, g2, be2)


def double_conv(x_nchw, params, *, row_tile=8):
    """Pallas implementation of DoubleConv.forward; x_nchw is NCHW (PyTorch layout)."""
    # Conv biases (_b1, _b2) are intentionally unused: they are exactly cancelled by
    # the BatchNorm mean subtraction (training-mode statistics).
    w1, _b1, g1, be1, w2, _b2, g2, be2 = params
    n, cin, h, width = x_nchw.shape
    cmid, cout = w1.shape[3], w2.shape[3]
    cp1 = _round_up(cmid, 128)          # lane-dense channel padding
    cp2 = _round_up(cout, 128)
    th = row_tile if h % row_tile == 0 else h
    count = float(n * h * width)

    x = jnp.transpose(x_nchw, (0, 2, 3, 1)).astype(jnp.float32)      # NCHW -> NHWC

    # ---- conv1, tiled over N x H-row blocks, with per-block BN statistics ----
    xblk = _overlap_row_blocks(
        _fuse_kw_taps(jnp.pad(x, ((0, 0), (1, 1), (1, 1), (0, 0)))), th)
    y1, s1, q1 = _conv3x3_blocks(xblk, _pack_weight(w1, cp1))

    # ---- BN1 + ReLU (exact batch statistics, folded scale/shift, lane-dense) ----
    sc1, sh1 = _bn_scale_shift(s1, q1, g1, be1, count, cp1)
    h1 = _bn_relu(y1.reshape(n * h * width, cp1), sc1, sh1)

    # ---- conv2 on the normalized intermediate ----
    h1_nhwc = h1.reshape(n, h, width, cp1)[..., :cmid]
    h1blk = _overlap_row_blocks(
        _fuse_kw_taps(jnp.pad(h1_nhwc, ((0, 0), (1, 1), (1, 1), (0, 0)))), th)
    y2, s2, q2 = _conv3x3_blocks(h1blk, _pack_weight(w2, cp2))

    # ---- BN2 + ReLU ----
    sc2, sh2 = _bn_scale_shift(s2, q2, g2, be2, count, cp2)
    h2 = _bn_relu(y2.reshape(n * h * width, cp2), sc2, sh2)

    out = h2.reshape(n, h, width, cp2)[..., :cout]
    return jnp.transpose(out, (0, 3, 1, 2))                          # NHWC -> NCHW


def double_conv_ref(x_nchw, params):
    """Pure-JAX reference (same semantics as the PyTorch module) for validation."""
    w1, b1, g1, be1, w2, b2, g2, be2 = params

    def conv(x, w, b):
        y = lax.conv_general_dilated(x, w, window_strides=(1, 1), padding="SAME",
                                     dimension_numbers=("NCHW", "HWIO", "NCHW"))
        return y + b[None, :, None, None]

    def bn_relu(x, g, be):
        mean = jnp.mean(x, axis=(0, 2, 3), keepdims=True)
        var = jnp.mean((x - mean) ** 2, axis=(0, 2, 3), keepdims=True)
        y = (x - mean) * lax.rsqrt(var + EPS) * g[None, :, None, None] + be[None, :, None, None]
        return jnp.maximum(y, 0.0)

    hidden = bn_relu(conv(x_nchw, w1, b1), g1, be1)
    return bn_relu(conv(hidden, w2, b2), g2, be2)


if __name__ == "__main__":
    key = jax.random.PRNGKey(0)
    kx, kp = jax.random.split(key)

    N, Cin, H, W = 2, 4, 16, 16
    Cout = 8            # mid_channels defaults to out_channels

    x = jax.random.normal(kx, (N, Cin, H, W), jnp.float32)
    params = init_params(kp, Cin, Cout)

    y = jax.block_until_ready(jax.jit(double_conv)(x, params))
    assert y.shape == (N, Cout, H, W), y.shape

    y_ref = double_conv_ref(x, params)
    max_err = float(jnp.max(jnp.abs(y - y_ref)))
    if not max_err < 1e-3:
        raise AssertionError(f"mismatch vs reference: max abs err {max_err}")

    print("KERNEL_OK")
</pallas_src>

<mosaic_0001>
module attributes {stable_mosaic.version = 11 : i64} {
  func.func @_conv3x3_stats_kernel(%arg0: i32, %arg1: memref<1x10x16x12xf32, #tpu.memory_space<vmem>>, %arg2: memref<3x12x128xf32, #tpu.memory_space<vmem>>, %arg3: memref<1x128x128xf32, #tpu.memory_space<vmem>>, %arg4: memref<1x1x128xf32, #tpu.memory_space<vmem>>, %arg5: memref<1x1x128xf32, #tpu.memory_space<vmem>>) attributes {dimension_semantics = [#tpu.dimension_semantics<parallel>], iteration_bounds = array<i64: 4>, scalar_prefetch = 0 : i64, scratch_operands = 0 : i64, tpu.core_type = #tpu.core_type<tc>, window_params = [{transform_indices = @transform_0, window_bounds = array<i64: 1, 10, 16, 12>}, {pipeline_mode = #tpu.pipeline_mode<synchronous>, transform_indices = @transform_1, window_bounds = array<i64: 3, 12, 128>}, {transform_indices = @transform_2, window_bounds = array<i64: 1, 128, 128>}, {transform_indices = @transform_3, window_bounds = array<i64: 1, 1, 128>}, {transform_indices = @transform_4, window_bounds = array<i64: 1, 1, 128>}]} {
    %c0 = arith.constant 0 : index
    %c0_0 = arith.constant 0 : index
    %c0_1 = arith.constant 0 : index
    %c0_2 = arith.constant 0 : index
    %0 = vector.load %arg1[%c0, %c0_0, %c0_1, %c0_2] : memref<1x10x16x12xf32, #tpu.memory_space<vmem>>, vector<1x8x16x12xf32>
    %1 = vector.shape_cast %0 : vector<1x8x16x12xf32> to vector<8x16x12xf32>
    %2 = vector.shape_cast %1 : vector<8x16x12xf32> to vector<128x12xf32>
    %c0_3 = arith.constant 0 : index
    %c0_4 = arith.constant 0 : index
    %c0_5 = arith.constant 0 : index
    %3 = vector.load %arg2[%c0_3, %c0_4, %c0_5] : memref<3x12x128xf32, #tpu.memory_space<vmem>>, vector<1x12x128xf32>
    %4 = vector.shape_cast %3 : vector<1x12x128xf32> to vector<12x128xf32>
    %cst = arith.constant dense<0.000000e+00> : vector<128x128xf32>
    %5 = tpu.matmul %2, %4, %cst {dimension_numbers = #tpu.dot_dimension_numbers<[1], [0], [0], [1], [0, 0, 1, 1], [], []>} : vector<128x12xf32>, vector<12x128xf32>, vector<128x128xf32> -> vector<128x128xf32>
    %c0_6 = arith.constant 0 : index
    %c1 = arith.constant 1 : index
    %c0_7 = arith.constant 0 : index
    %c0_8 = arith.constant 0 : index
    %6 = vector.load %arg1[%c0_6, %c1, %c0_7, %c0_8] : memref<1x10x16x12xf32, #tpu.memory_space<vmem>>, vector<1x8x16x12xf32>
    %7 = vector.shape_cast %6 : vector<1x8x16x12xf32> to vector<8x16x12xf32>
    %8 = vector.shape_cast %7 : vector<8x16x12xf32> to vector<128x12xf32>
    %c1_9 = arith.constant 1 : index
    %c0_10 = arith.constant 0 : index
    %c0_11 = arith.constant 0 : index
    %9 = vector.load %arg2[%c1_9, %c0_10, %c0_11] : memref<3x12x128xf32, #tpu.memory_space<vmem>>, vector<1x12x128xf32>
    %10 = vector.shape_cast %9 : vector<1x12x128xf32> to vector<12x128xf32>
    %cst_12 = arith.constant dense<0.000000e+00> : vector<128x128xf32>
    %11 = tpu.matmul %8, %10, %cst_12 {dimension_numbers = #tpu.dot_dimension_numbers<[1], [0], [0], [1], [0, 0, 1, 1], [], []>} : vector<128x12xf32>, vector<12x128xf32>, vector<128x128xf32> -> vector<128x128xf32>
    %12 = arith.addf %5, %11 : vector<128x128xf32>
    %c0_13 = arith.constant 0 : index
    %c2 = arith.constant 2 : index
    %c0_14 = arith.constant 0 : index
    %c0_15 = arith.constant 0 : index
    %13 = vector.load %arg1[%c0_13, %c2, %c0_14, %c0_15] : memref<1x10x16x12xf32, #tpu.memory_space<vmem>>, vector<1x8x16x12xf32>
    %14 = vector.shape_cast %13 : vector<1x8x16x12xf32> to vector<8x16x12xf32>
    %15 = vector.shape_cast %14 : vector<8x16x12xf32> to vector<128x12xf32>
    %c2_16 = arith.constant 2 : index
    %c0_17 = arith.constant 0 : index
    %c0_18 = arith.constant 0 : index
    %16 = vector.load %arg2[%c2_16, %c0_17, %c0_18] : memref<3x12x128xf32, #tpu.memory_space<vmem>>, vector<1x12x128xf32>
    %17 = vector.shape_cast %16 : vector<1x12x128xf32> to vector<12x128xf32>
    %cst_19 = arith.constant dense<0.000000e+00> : vector<128x128xf32>
    %18 = tpu.matmul %15, %17, %cst_19 {dimension_numbers = #tpu.dot_dimension_numbers<[1], [0], [0], [1], [0, 0, 1, 1], [], []>} : vector<128x12xf32>, vector<12x128xf32>, vector<128x128xf32> -> vector<128x128xf32>
    %19 = arith.addf %12, %18 : vector<128x128xf32>
    %c0_20 = arith.constant 0 : index
    %c0_21 = arith.constant 0 : index
    %c0_22 = arith.constant 0 : index
    %20 = vector.load %arg3[%c0_20, %c0_21, %c0_22] : memref<1x128x128xf32, #tpu.memory_space<vmem>>, vector<1x128x128xf32>
    %21 = vector.shape_cast %20 : vector<1x128x128xf32> to vector<128x128xf32>
    %22 = vector.shape_cast %19 : vector<128x128xf32> to vector<1x128x128xf32>
    tpu.vector_store %arg3[%c0_20, %c0_21, %c0_22], %22 {strides = array<i32>} : memref<1x128x128xf32, #tpu.memory_space<vmem>>, vector<1x128x128xf32>,
    %cst_23 = arith.constant dense<0.000000e+00> : vector<128xf32>
    %23 = vector.multi_reduction <add>, %19, %cst_23 [0] : vector<128x128xf32> to vector<128xf32>
    %24 = vector.shape_cast %23 : vector<128xf32> to vector<1x128xf32>
    %c0_24 = arith.constant 0 : index
    %c0_25 = arith.constant 0 : index
    %c0_26 = arith.constant 0 : index
    %25 = vector.load %arg4[%c0_24, %c0_25, %c0_26] : memref<1x1x128xf32, #tpu.memory_space<vmem>>, vector<1x1x128xf32>
    %26 = vector.shape_cast %25 : vector<1x1x128xf32> to vector<1x128xf32>
    %27 = vector.shape_cast %24 : vector<1x128xf32> to vector<1x1x128xf32>
    tpu.vector_store %arg4[%c0_24, %c0_25, %c0_26], %27 {strides = array<i32>} : memref<1x1x128xf32, #tpu.memory_space<vmem>>, vector<1x1x128xf32>,
    %28 = arith.mulf %19, %19 : vector<128x128xf32>
    %cst_27 = arith.constant dense<0.000000e+00> : vector<128xf32>
    %29 = vector.multi_reduction <add>, %28, %cst_27 [0] : vector<128x128xf32> to vector<128xf32>
    %30 = vector.shape_cast %29 : vector<128xf32> to vector<1x128xf32>
    %c0_28 = arith.constant 0 : index
    %c0_29 = arith.constant 0 : index
    %c0_30 = arith.constant 0 : index
    %31 = vector.load %arg5[%c0_28, %c0_29, %c0_30] : memref<1x1x128xf32, #tpu.memory_space<vmem>>, vector<1x1x128xf32>
    %32 = vector.shape_cast %31 : vector<1x1x128xf32> to vector<1x128xf32>
    %33 = vector.shape_cast %30 : vector<1x128xf32> to vector<1x1x128xf32>
    tpu.vector_store %arg5[%c0_28, %c0_29, %c0_30], %33 {strides = array<i32>} : memref<1x1x128xf32, #tpu.memory_space<vmem>>, vector<1x1x128xf32>,
    return
  }
  func.func @transform_0(%arg0: i32) -> (i32, i32, i32, i32) {
    %c0_i32 = arith.constant 0 : i32
    %c0_i32_0 = arith.constant 0 : i32
    %c0_i32_1 = arith.constant 0 : i32
    %c0_i32_2 = arith.constant 0 : i32
    return %arg0, %c0_i32, %c0_i32_0, %c0_i32_1 : i32, i32, i32, i32
  }
  func.func @transform_1(%arg0: i32) -> (i32, i32, i32) {
    %c0_i32 = arith.constant 0 : i32
    %c0_i32_0 = arith.constant 0 : i32
    %c0_i32_1 = arith.constant 0 : i32
    %c0_i32_2 = arith.constant 0 : i32
    return %c0_i32, %c0_i32_0, %c0_i32_1 : i32, i32, i32
  }
  func.func @transform_2(%arg0: i32) -> (i32, i32, i32) {
    %c0_i32 = arith.constant 0 : i32
    %c0_i32_0 = arith.constant 0 : i32
    %c0_i32_1 = arith.constant 0 : i32
    return %arg0, %c0_i32, %c0_i32_0 : i32, i32, i32
  }
  func.func @transform_3(%arg0: i32) -> (i32, i32, i32) {
    %c0_i32 = arith.constant 0 : i32
    %c0_i32_0 = arith.constant 0 : i32
    %c0_i32_1 = arith.constant 0 : i32
    return %arg0, %c0_i32, %c0_i32_0 : i32, i32, i32
  }
  func.func @transform_4(%arg0: i32) -> (i32, i32, i32) {
    %c0_i32 = arith.constant 0 : i32
    %c0_i32_0 = arith.constant 0 : i32
    %c0_i32_1 = arith.constant 0 : i32
    return %arg0, %c0_i32, %c0_i32_0 : i32, i32, i32
  }
}

module attributes {stable_mosaic.version = 11 : i64} {
  func.func @_bn_relu_kernel(%arg0: i32, %arg1: memref<128x128xf32, #tpu.memory_space<vmem>>, %arg2: memref<1x128xf32, #tpu.memory_space<vmem>>, %arg3: memref<1x128xf32, #tpu.memory_space<vmem>>, %arg4: memref<128x128xf32, #tpu.memory_space<vmem>>) attributes {dimension_semantics = [#tpu.dimension_semantics<parallel>], iteration_bounds = array<i64: 4>, scalar_prefetch = 0 : i64, scratch_operands = 0 : i64, tpu.core_type = #tpu.core_type<tc>, window_params = [{transform_indices = @transform_0, window_bounds = array<i64: 128, 128>}, {pipeline_mode = #tpu.pipeline_mode<synchronous>, transform_indices = @transform_1, window_bounds = array<i64: 1, 128>}, {pipeline_mode = #tpu.pipeline_mode<synchronous>, transform_indices = @transform_2, window_bounds = array<i64: 1, 128>}, {transform_indices = @transform_3, window_bounds = array<i64: 128, 128>}]} {
    %c0 = arith.constant 0 : index
    %c0_0 = arith.constant 0 : index
    %0 = vector.load %arg1[%c0, %c0_0] : memref<128x128xf32, #tpu.memory_space<vmem>>, vector<128x128xf32>
    %c0_1 = arith.constant 0 : index
    %c0_2 = arith.constant 0 : index
    %1 = vector.load %arg2[%c0_1, %c0_2] : memref<1x128xf32, #tpu.memory_space<vmem>>, vector<1x128xf32>
    %2 = vector.broadcast %1 : vector<1x128xf32> to vector<128x128xf32>
    %3 = arith.mulf %0, %2 : vector<128x128xf32>
    %c0_3 = arith.constant 0 : index
    %c0_4 = arith.constant 0 : index
    %4 = vector.load %arg3[%c0_3, %c0_4] : memref<1x128xf32, #tpu.memory_space<vmem>>, vector<1x128xf32>
    %5 = vector.broadcast %4 : vector<1x128xf32> to vector<128x128xf32>
    %6 = arith.addf %3, %5 : vector<128x128xf32>
    %cst = arith.constant 0.000000e+00 : f32
    %7 = vector.broadcast %cst : f32 to vector<128x128xf32>
    %8 = arith.maximumf %6, %7 : vector<128x128xf32>
    %c0_5 = arith.constant 0 : index
    %c0_6 = arith.constant 0 : index
    %9 = vector.load %arg4[%c0_5, %c0_6] : memref<128x128xf32, #tpu.memory_space<vmem>>, vector<128x128xf32>
    tpu.vector_store %arg4[%c0_5, %c0_6], %8 {strides = array<i32>} : memref<128x128xf32, #tpu.memory_space<vmem>>, vector<128x128xf32>,
    return
  }
  func.func @transform_0(%arg0: i32) -> (i32, i32) {
    %c0_i32 = arith.constant 0 : i32
    %c0_i32_0 = arith.constant 0 : i32
    return %arg0, %c0_i32 : i32, i32
  }
  func.func @transform_1(%arg0: i32) -> (i32, i32) {
    %c0_i32 = arith.constant 0 : i32
    %c0_i32_0 = arith.constant 0 : i32
    %c0_i32_1 = arith.constant 0 : i32
    return %c0_i32, %c0_i32_0 : i32, i32
  }
  func.func @transform_2(%arg0: i32) -> (i32, i32) {
    %c0_i32 = arith.constant 0 : i32
    %c0_i32_0 = arith.constant 0 : i32
    %c0_i32_1 = arith.constant 0 : i32
    return %c0_i32, %c0_i32_0 : i32, i32
  }
  func.func @transform_3(%arg0: i32) -> (i32, i32) {
    %c0_i32 = arith.constant 0 : i32
    %c0_i32_0 = arith.constant 0 : i32
    return %arg0, %c0_i32 : i32, i32
  }
}

module attributes {stable_mosaic.version = 11 : i64} {
  func.func @_conv3x3_stats_kernel(%arg0: i32, %arg1: memref<1x10x16x24xf32, #tpu.memory_space<vmem>>, %arg2: memref<3x24x128xf32, #tpu.memory_space<vmem>>, %arg3: memref<1x128x128xf32, #tpu.memory_space<vmem>>, %arg4: memref<1x1x128xf32, #tpu.memory_space<vmem>>, %arg5: memref<1x1x128xf32, #tpu.memory_space<vmem>>) attributes {dimension_semantics = [#tpu.dimension_semantics<parallel>], iteration_bounds = array<i64: 4>, scalar_prefetch = 0 : i64, scratch_operands = 0 : i64, tpu.core_type = #tpu.core_type<tc>, window_params = [{transform_indices = @transform_0, window_bounds = array<i64: 1, 10, 16, 24>}, {pipeline_mode = #tpu.pipeline_mode<synchronous>, transform_indices = @transform_1, window_bounds = array<i64: 3, 24, 128>}, {transform_indices = @transform_2, window_bounds = array<i64: 1, 128, 128>}, {transform_indices = @transform_3, window_bounds = array<i64: 1, 1, 128>}, {transform_indices = @transform_4, window_bounds = array<i64: 1, 1, 128>}]} {
    %c0 = arith.constant 0 : index
    %c0_0 = arith.constant 0 : index
    %c0_1 = arith.constant 0 : index
    %c0_2 = arith.constant 0 : index
    %0 = vector.load %arg1[%c0, %c0_0, %c0_1, %c0_2] : memref<1x10x16x24xf32, #tpu.memory_space<vmem>>, vector<1x8x16x24xf32>
    %1 = vector.shape_cast %0 : vector<1x8x16x24xf32> to vector<8x16x24xf32>
    %2 = vector.shape_cast %1 : vector<8x16x24xf32> to vector<128x24xf32>
    %c0_3 = arith.constant 0 : index
    %c0_4 = arith.constant 0 : index
    %c0_5 = arith.constant 0 : index
    %3 = vector.load %arg2[%c0_3, %c0_4, %c0_5] : memref<3x24x128xf32, #tpu.memory_space<vmem>>, vector<1x24x128xf32>
    %4 = vector.shape_cast %3 : vector<1x24x128xf32> to vector<24x128xf32>
    %cst = arith.constant dense<0.000000e+00> : vector<128x128xf32>
    %5 = tpu.matmul %2, %4, %cst {dimension_numbers = #tpu.dot_dimension_numbers<[1], [0], [0], [1], [0, 0, 1, 1], [], []>} : vector<128x24xf32>, vector<24x128xf32>, vector<128x128xf32> -> vector<128x128xf32>
    %c0_6 = arith.constant 0 : index
    %c1 = arith.constant 1 : index
    %c0_7 = arith.constant 0 : index
    %c0_8 = arith.constant 0 : index
    %6 = vector.load %arg1[%c0_6, %c1, %c0_7, %c0_8] : memref<1x10x16x24xf32, #tpu.memory_space<vmem>>, vector<1x8x16x24xf32>
    %7 = vector.shape_cast %6 : vector<1x8x16x24xf32> to vector<8x16x24xf32>
    %8 = vector.shape_cast %7 : vector<8x16x24xf32> to vector<128x24xf32>
    %c1_9 = arith.constant 1 : index
    %c0_10 = arith.constant 0 : index
    %c0_11 = arith.constant 0 : index
    %9 = vector.load %arg2[%c1_9, %c0_10, %c0_11] : memref<3x24x128xf32, #tpu.memory_space<vmem>>, vector<1x24x128xf32>
    %10 = vector.shape_cast %9 : vector<1x24x128xf32> to vector<24x128xf32>
    %cst_12 = arith.constant dense<0.000000e+00> : vector<128x128xf32>
    %11 = tpu.matmul %8, %10, %cst_12 {dimension_numbers = #tpu.dot_dimension_numbers<[1], [0], [0], [1], [0, 0, 1, 1], [], []>} : vector<128x24xf32>, vector<24x128xf32>, vector<128x128xf32> -> vector<128x128xf32>
    %12 = arith.addf %5, %11 : vector<128x128xf32>
    %c0_13 = arith.constant 0 : index
    %c2 = arith.constant 2 : index
    %c0_14 = arith.constant 0 : index
    %c0_15 = arith.constant 0 : index
    %13 = vector.load %arg1[%c0_13, %c2, %c0_14, %c0_15] : memref<1x10x16x24xf32, #tpu.memory_space<vmem>>, vector<1x8x16x24xf32>
    %14 = vector.shape_cast %13 : vector<1x8x16x24xf32> to vector<8x16x24xf32>
    %15 = vector.shape_cast %14 : vector<8x16x24xf32> to vector<128x24xf32>
    %c2_16 = arith.constant 2 : index
    %c0_17 = arith.constant 0 : index
    %c0_18 = arith.constant 0 : index
    %16 = vector.load %arg2[%c2_16, %c0_17, %c0_18] : memref<3x24x128xf32, #tpu.memory_space<vmem>>, vector<1x24x128xf32>
    %17 = vector.shape_cast %16 : vector<1x24x128xf32> to vector<24x128xf32>
    %cst_19 = arith.constant dense<0.000000e+00> : vector<128x128xf32>
    %18 = tpu.matmul %15, %17, %cst_19 {dimension_numbers = #tpu.dot_dimension_numbers<[1], [0], [0], [1], [0, 0, 1, 1], [], []>} : vector<128x24xf32>, vector<24x128xf32>, vector<128x128xf32> -> vector<128x128xf32>
    %19 = arith.addf %12, %18 : vector<128x128xf32>
    %c0_20 = arith.constant 0 : index
    %c0_21 = arith.constant 0 : index
    %c0_22 = arith.constant 0 : index
    %20 = vector.load %arg3[%c0_20, %c0_21, %c0_22] : memref<1x128x128xf32, #tpu.memory_space<vmem>>, vector<1x128x128xf32>
    %21 = vector.shape_cast %20 : vector<1x128x128xf32> to vector<128x128xf32>
    %22 = vector.shape_cast %19 : vector<128x128xf32> to vector<1x128x128xf32>
    tpu.vector_store %arg3[%c0_20, %c0_21, %c0_22], %22 {strides = array<i32>} : memref<1x128x128xf32, #tpu.memory_space<vmem>>, vector<1x128x128xf32>,
    %cst_23 = arith.constant dense<0.000000e+00> : vector<128xf32>
    %23 = vector.multi_reduction <add>, %19, %cst_23 [0] : vector<128x128xf32> to vector<128xf32>
    %24 = vector.shape_cast %23 : vector<128xf32> to vector<1x128xf32>
    %c0_24 = arith.constant 0 : index
    %c0_25 = arith.constant 0 : index
    %c0_26 = arith.constant 0 : index
    %25 = vector.load %arg4[%c0_24, %c0_25, %c0_26] : memref<1x1x128xf32, #tpu.memory_space<vmem>>, vector<1x1x128xf32>
    %26 = vector.shape_cast %25 : vector<1x1x128xf32> to vector<1x128xf32>
    %27 = vector.shape_cast %24 : vector<1x128xf32> to vector<1x1x128xf32>
    tpu.vector_store %arg4[%c0_24, %c0_25, %c0_26], %27 {strides = array<i32>} : memref<1x1x128xf32, #tpu.memory_space<vmem>>, vector<1x1x128xf32>,
    %28 = arith.mulf %19, %19 : vector<128x128xf32>
    %cst_27 = arith.constant dense<0.000000e+00> : vector<128xf32>
    %29 = vector.multi_reduction <add>, %28, %cst_27 [0] : vector<128x128xf32> to vector<128xf32>
    %30 = vector.shape_cast %29 : vector<128xf32> to vector<1x128xf32>
    %c0_28 = arith.constant 0 : index
    %c0_29 = arith.constant 0 : index
    %c0_30 = arith.constant 0 : index
    %31 = vector.load %arg5[%c0_28, %c0_29, %c0_30] : memref<1x1x128xf32, #tpu.memory_space<vmem>>, vector<1x1x128xf32>
    %32 = vector.shape_cast %31 : vector<1x1x128xf32> to vector<1x128xf32>
    %33 = vector.shape_cast %30 : vector<1x128xf32> to vector<1x1x128xf32>
    tpu.vector_store %arg5[%c0_28, %c0_29, %c0_30], %33 {strides = array<i32>} : memref<1x1x128xf32, #tpu.memory_space<vmem>>, vector<1x1x128xf32>,
    return
  }
  func.func @transform_0(%arg0: i32) -> (i32, i32, i32, i32) {
    %c0_i32 = arith.constant 0 : i32
    %c0_i32_0 = arith.constant 0 : i32
    %c0_i32_1 = arith.constant 0 : i32
    %c0_i32_2 = arith.constant 0 : i32
    return %arg0, %c0_i32, %c0_i32_0, %c0_i32_1 : i32, i32, i32, i32
  }
  func.func @transform_1(%arg0: i32) -> (i32, i32, i32) {
    %c0_i32 = arith.constant 0 : i32
    %c0_i32_0 = arith.constant 0 : i32
    %c0_i32_1 = arith.constant 0 : i32
    %c0_i32_2 = arith.constant 0 : i32
    return %c0_i32, %c0_i32_0, %c0_i32_1 : i32, i32, i32
  }
  func.func @transform_2(%arg0: i32) -> (i32, i32, i32) {
    %c0_i32 = arith.constant 0 : i32
    %c0_i32_0 = arith.constant 0 : i32
    %c0_i32_1 = arith.constant 0 : i32
    return %arg0, %c0_i32, %c0_i32_0 : i32, i32, i32
  }
  func.func @transform_3(%arg0: i32) -> (i32, i32, i32) {
    %c0_i32 = arith.constant 0 : i32
    %c0_i32_0 = arith.constant 0 : i32
    %c0_i32_1 = arith.constant 0 : i32
    return %arg0, %c0_i32, %c0_i32_0 : i32, i32, i32
  }
  func.func @transform_4(%arg0: i32) -> (i32, i32, i32) {
    %c0_i32 = arith.constant 0 : i32
    %c0_i32_0 = arith.constant 0 : i32
    %c0_i32_1 = arith.constant 0 : i32
    return %arg0, %c0_i32, %c0_i32_0 : i32, i32, i32
  }
}

</mosaic_0001>

<llo_original>
// kernel: double_conv.5
$region0: #{double_conv.5}
  #allocation0 [shape = 'u32[]', space=smem, size = 0x4, offset = 0x4, fixed_abs, tag = 'smem constant byte address 0x4 - core index']
  #allocation1 [shape = 'u32[144,128]{1,0:T(1,128)}', space=vmem, size = 0x12000, scoped, tag = 'internal scratch']
  %s0 = inlined_call_operand.vmem [shape: f32[512,128], index: 0, kind: input, shape index: {}]
  %s1 = inlined_call_operand.vmem [shape: f32[1,128], index: 1, kind: input, shape index: {}]
  %s2 = inlined_call_operand.vmem [shape: f32[1,128], index: 2, kind: input, shape index: {}]
  %s3 = inlined_call_operand.vmem [shape: f32[512,128], index: 3, kind: output, shape index: {}]
  %s4 = sld [smem:[#allocation0]]
  $region45: #{double_conv.5} parent=0
    _
  %s6 = ssub.s32 1, %s4
  %s7 = scalar_select 0, %s6, %s4
  loop: start=0, step=1, limit=6
  $region2: #{double_conv.5} parent=0 // loop_pre_header
    _
  $region3: #{double_conv.5} parent=0 // loop_header
    %s9 = sphi 0, %s13
    %p10 = scmp.ge.s32.totalorder %s9, 6
    %s19 = sphi 0, %s21
    %s22 = sphi 0, %s19
    %s23 = sphi 0, %s22
    %s39 = sphi 0, %s23
    %s43 = sphi 0, %s43
    %s45 = sphi 0, %s43
    %s46 = sphi 0, %s45
    %s60 = sphi 0, %s46
    %s64 = sphi 0, %s64
    %s66 = sphi 0, %s64
    %s67 = sphi 0, %s66
    %s81 = sphi 0, %s67
    %s87 = sphi 0, %s89
    %s90 = sphi 0, %s87
    %s91 = sphi 0, %s90
    %s107 = sphi 0, %s91
  $region4: #{double_conv.5} parent=0 // loop_header_branch
    %12 = sbr.rel (%p10) target = $region8
  $region5: #{double_conv.5} parent=0 // loop_body
    %s14 = ssub.s32 %s9, 1
    %s15 = ssub.s32 %s9, 2
    %s16 = sadd.s32 %s9, 1
    %s17 = ssub.s32 %s9, %s16
    %p18 = scmp.eq.s32.totalorder %s17, 0
    %s20 = sadd.s32 %s19, 1
    %s21 = scalar_select %p18, %s19, %s20
    %p24 = pneg %p18
    %p25 = scmp.eq.s32.totalorder %s9, 3
    %p26 = por %p24, %p25
    %p27 = scmp.ne.s32.totalorder %s19, %s22
    %p28 = scmp.eq.s32.totalorder %s9, 0
    %p29 = por %p27, %p28
    %p30 = scmp.ne.s32.totalorder %s19, %s22
    %p31 = scmp.eq.s32.totalorder %s14, 3
    %p32 = por %p30, %p31
    %p33 = scmp.ne.s32.totalorder %s22, %s23
    %p34 = scmp.eq.s32.totalorder %s14, 0
    %p35 = por %p33, %p34
    %p36 = scmp.ne.s32.totalorder %s22, %s23
    %p37 = scmp.eq.s32.totalorder %s15, 3
    %p38 = por %p36, %p37
    %p40 = scmp.ne.s32.totalorder %s23, %s39
    %p41 = scmp.eq.s32.totalorder %s15, 0
    %p42 = por %p40, %p41
    %s44 = sadd.s32 %s43, 1
    %p47 = scmp.eq.s32.totalorder %s9, 3
    %p48 = scmp.ne.s32.totalorder %s43, %s45
    %p49 = scmp.eq.s32.totalorder %s9, 0
    %p50 = por %p48, %p49
    %p51 = scmp.ne.s32.totalorder %s43, %s45
    %p52 = scmp.eq.s32.totalorder %s14, 3
    %p53 = por %p51, %p52
    %p54 = scmp.ne.s32.totalorder %s45, %s46
    %p55 = scmp.eq.s32.totalorder %s14, 0
    %p56 = por %p54, %p55
    %p57 = scmp.ne.s32.totalorder %s45, %s46
    %p58 = scmp.eq.s32.totalorder %s15, 3
    %p59 = por %p57, %p58
    %p61 = scmp.ne.s32.totalorder %s46, %s60
    %p62 = scmp.eq.s32.totalorder %s15, 0
    %p63 = por %p61, %p62
    %s65 = sadd.s32 %s64, 1
    %p68 = scmp.eq.s32.totalorder %s9, 3
    %p69 = scmp.ne.s32.totalorder %s64, %s66
    %p70 = scmp.eq.s32.totalorder %s9, 0
    %p71 = por %p69, %p70
    %p72 = scmp.ne.s32.totalorder %s64, %s66
    %p73 = scmp.eq.s32.totalorder %s14, 3
    %p74 = por %p72, %p73
    %p75 = scmp.ne.s32.totalorder %s66, %s67
    %p76 = scmp.eq.s32.totalorder %s14, 0
    %p77 = por %p75, %p76
    %p78 = scmp.ne.s32.totalorder %s66, %s67
    %p79 = scmp.eq.s32.totalorder %s15, 3
    %p80 = por %p78, %p79
    %p82 = scmp.ne.s32.totalorder %s67, %s81
    %p83 = scmp.eq.s32.totalorder %s15, 0
    %p84 = por %p82, %p83
    %s85 = ssub.s32 %s9, %s16
    %p86 = scmp.eq.s32.totalorder %s85, 0
    %s88 = sadd.s32 %s87, 1
    %s89 = scalar_select %p86, %s87, %s88
    %p92 = pneg %p86
    %p93 = scmp.eq.s32.totalorder %s9, 3
    %p94 = por %p92, %p93
    %p95 = scmp.ne.s32.totalorder %s87, %s90
    %p96 = scmp.eq.s32.totalorder %s9, 0
    %p97 = por %p95, %p96
    %p98 = scmp.ne.s32.totalorder %s87, %s90
    %p99 = scmp.eq.s32.totalorder %s14, 3
    %p100 = por %p98, %p99
    %p101 = scmp.ne.s32.totalorder %s90, %s91
    %p102 = scmp.eq.s32.totalorder %s14, 0
    %p103 = por %p101, %p102
    %p104 = scmp.ne.s32.totalorder %s90, %s91
    %p105 = scmp.eq.s32.totalorder %s15, 3
    %p106 = por %p104, %p105
    %p108 = scmp.ne.s32.totalorder %s91, %s107
    %p109 = scmp.eq.s32.totalorder %s15, 0
    %p110 = por %p108, %p109
    %p111 = scmp.le.s32.totalorder 1, %s9
    %p112 = scmp.lt.s32.totalorder %s9, 5
    %p113 = pnand %p111, %p112
    %p114 = pneg %p113
    // Predicated region
    $region9: #{double_conv.5} parent=5 // pred_check
      _
    $region10: #{double_conv.5} parent=5 // pred_check_branch
      %116 = sbr.rel (%p113) target = $region12
    $region11: #{double_conv.5} parent=5 // pred_region
      %s117 = ssub.s32 %s9, 1
      // Predicated region
      $region13: #{double_conv.5} parent=11 // pred_check
        %p118 = pneg %p56
      $region14: #{double_conv.5} parent=11 // pred_check_branch
        %120 = sbr.rel (%p118) target = $region16
      $region15: #{double_conv.5} parent=11 // pred_region
        _
      $region16: #{double_conv.5} parent=11 // pred_fallthru
        _
      // Predicated region
      $region17: #{double_conv.5} parent=11 // pred_check
        %p121 = pneg %p77
      $region18: #{double_conv.5} parent=11 // pred_check_branch
        %123 = sbr.rel (%p121) target = $region20
      $region19: #{double_conv.5} parent=11 // pred_region
        _
      $region20: #{double_conv.5} parent=11 // pred_fallthru
        _
    $region12: #{double_conv.5} parent=5 // pred_fallthru
      _
    %p124 = scmp.lt.s32.totalorder %s9, 4
    // Predicated region
    $region21: #{double_conv.5} parent=5 // pred_check
      %p125 = pneg %p124
    $region22: #{double_conv.5} parent=5 // pred_check_branch
      %127 = sbr.rel (%p125) target = $region24
    $region23: #{double_conv.5} parent=5 // pred_region
      // Predicated region
      $region25: #{double_conv.5} parent=23 // pred_check
        %p128 = pneg %p29
      $region26: #{double_conv.5} parent=23 // pred_check_branch
        %130 = sbr.rel (%p128) target = $region28
      $region27: #{double_conv.5} parent=23 // pred_region
        %s131 = smul.u32 16, %s9
        %p132 = scmp.lt.s32.totalorder %s131, 63
        %s133 = scalar_select %p132, %s131, 63
        %s134 = smul.addr %s133, 8
        %s135 = scalar_lea.vmem %s0, %s134
        %s136 = smul.u32 16, %s9
      $region28: #{double_conv.5} parent=23 // pred_fallthru
        _
    $region24: #{double_conv.5} parent=5 // pred_fallthru
      _
    %p137 = scmp.le.s32.totalorder 1, %s9
    %p138 = scmp.lt.s32.totalorder %s9, 5
    %p139 = pnand %p137, %p138
    %p140 = pneg %p139
    // Predicated region
    $region29: #{double_conv.5} parent=5 // pred_check
      _
    $region30: #{double_conv.5} parent=5 // pred_check_branch
      %142 = sbr.rel (%p139) target = $region32
    $region31: #{double_conv.5} parent=5 // pred_region
      %s143 = ssub.s32 %s9, 1
      %s144 = smul.u32 16, %s14
      %p145 = scmp.lt.s32.totalorder %s144, 63
      %s146 = scalar_select %p145, %s144, 63
      %s147 = smul.addr %s146, 8
      %s148 = scalar_lea.vmem %s0, %s147
      %p149 = pneg %p35
      %p150 = pneg %p32
      %p151 = pneg %p56
      %p152 = pneg %p53
      %p153 = pneg %p77
      %p154 = pneg %p74
      %p155 = pneg %p103
      %p156 = pneg %p100
      %s157 = smul.u32 16, %s14
      %p158 = scmp.lt.s32.totalorder %s157, 63
      %s159 = scalar_select %p158, %s157, 63
      %s160 = smul.addr %s159, 8
      %s161 = scalar_lea.vmem %s3, %s160
      %s162 = smul.u32 16, %s14
      %p163 = scmp.lt.s32.totalorder %s162, 63
      %s164 = scalar_select %p163, %s162, 63
      %s165 = smul.addr %s164, 8
      %s166 = scalar_lea.vmem %s0, %s165
      %s167 = smul.u32 16, %s14
      %s168 = smul.u32 16, %s14
      %p169 = scmp.lt.s32.totalorder %s168, 63
      %s170 = scalar_select %p169, %s168, 63
      %s171 = smul.addr %s170, 8
      %s172 = scalar_lea.vmem %s3, %s171
      %s173 = smul.u32 16, %s14
      %v174 = vld [vmem:[%s166] sm:$0xff]
      %v175 = vld [vmem:[%s166 + $0x8] sm:$0xff]
      %v176 = vld [vmem:[%s166 + $0x10] sm:$0xff]
      %v177 = vld [vmem:[%s166 + $0x18] sm:$0xff]
      %v178 = vld [vmem:[%s166 + $0x20] sm:$0xff]
      %v179 = vld [vmem:[%s166 + $0x28] sm:$0xff]
      %v180 = vld [vmem:[%s166 + $0x30] sm:$0xff]
      %v181 = vld [vmem:[%s166 + $0x38] sm:$0xff]
      %v182 = vld [vmem:[%s166 + $0x40] sm:$0xff]
      %v183 = vld [vmem:[%s166 + $0x48] sm:$0xff]
      %v184 = vld [vmem:[%s166 + $0x50] sm:$0xff]
      %v185 = vld [vmem:[%s166 + $0x58] sm:$0xff]
      %v186 = vld [vmem:[%s166 + $0x60] sm:$0xff]
      %v187 = vld [vmem:[%s166 + $0x68] sm:$0xff]
      %v188 = vld [vmem:[%s166 + $0x70] sm:$0xff]
      %v189 = vld [vmem:[%s166 + $0x78] sm:$0xff]
      %v190 = vld [vmem:[%s1] sm:$0x1]
      %v192 = vlaneseq
      %v193 = vshrl.u32 %v192, 7
      %v194 = vsub.s32 0, %v193
      %v195 = vrot.slane %v190, %v194
      %v197 = vmul.f32 %v174, %v195
      %v198 = vmul.f32 %v175, %v195
      %v199 = vmul.f32 %v176, %v195
      %v200 = vmul.f32 %v177, %v195
      %v201 = vmul.f32 %v178, %v195
      %v202 = vmul.f32 %v179, %v195
      %v203 = vmul.f32 %v180, %v195
      %v204 = vmul.f32 %v181, %v195
      %v205 = vmul.f32 %v182, %v195
      %v206 = vmul.f32 %v183, %v195
      %v207 = vmul.f32 %v184, %v195
      %v208 = vmul.f32 %v185, %v195
      %v209 = vmul.f32 %v186, %v195
      %v210 = vmul.f32 %v187, %v195
      %v211 = vmul.f32 %v188, %v195
      %v212 = vmul.f32 %v189, %v195
      %v213 = vld [vmem:[%s2] sm:$0x1]
      %v215 = vlaneseq
      %v216 = vshrl.u32 %v215, 7
      %v217 = vsub.s32 0, %v216
      %v218 = vrot.slane %v213, %v217
      %v220 = vadd.f32 %v197, %v218
      %v221 = vadd.f32 %v198, %v218
      %v222 = vadd.f32 %v199, %v218
      %v223 = vadd.f32 %v200, %v218
      %v224 = vadd.f32 %v201, %v218
      %v225 = vadd.f32 %v202, %v218
      %v226 = vadd.f32 %v203, %v218
      %v227 = vadd.f32 %v204, %v218
      %v228 = vadd.f32 %v205, %v218
      %v229 = vadd.f32 %v206, %v218
      %v230 = vadd.f32 %v207, %v218
      %v231 = vadd.f32 %v208, %v218
      %v232 = vadd.f32 %v209, %v218
      %v233 = vadd.f32 %v210, %v218
      %v234 = vadd.f32 %v211, %v218
      %v235 = vadd.f32 %v212, %v218
      %v236 = vmax.f32 %v220, 0.0
      %v237 = vmax.f32 %v221, 0.0
      %v238 = vmax.f32 %v222, 0.0
      %v239 = vmax.f32 %v223, 0.0
      %v240 = vmax.f32 %v224, 0.0
      %v241 = vmax.f32 %v225, 0.0
      %v242 = vmax.f32 %v226, 0.0
      %v243 = vmax.f32 %v227, 0.0
      %v244 = vmax.f32 %v228, 0.0
      %v245 = vmax.f32 %v229, 0.0
      %v246 = vmax.f32 %v230, 0.0
      %v247 = vmax.f32 %v231, 0.0
      %v248 = vmax.f32 %v232, 0.0
      %v249 = vmax.f32 %v233, 0.0
      %v250 = vmax.f32 %v234, 0.0
      %v251 = vmax.f32 %v235, 0.0
      %252 = vst [vmem:[%s172] sm:$0xff] %v236
      %253 = vst [vmem:[%s172 + $0x8] sm:$0xff] %v237
      %254 = vst [vmem:[%s172 + $0x10] sm:$0xff] %v238
      %255 = vst [vmem:[%s172 + $0x18] sm:$0xff] %v239
      %256 = vst [vmem:[%s172 + $0x20] sm:$0xff] %v240
      %257 = vst [vmem:[%s172 + $0x28] sm:$0xff] %v241
      %258 = vst [vmem:[%s172 + $0x30] sm:$0xff] %v242
      %259 = vst [vmem:[%s172 + $0x38] sm:$0xff] %v243
      %260 = vst [vmem:[%s172 + $0x40] sm:$0xff] %v244
      %261 = vst [vmem:[%s172 + $0x48] sm:$0xff] %v245
      %262 = vst [vmem:[%s172 + $0x50] sm:$0xff] %v246
      %263 = vst [vmem:[%s172 + $0x58] sm:$0xff] %v247
      %264 = vst [vmem:[%s172 + $0x60] sm:$0xff] %v248
      %265 = vst [vmem:[%s172 + $0x68] sm:$0xff] %v249
      %266 = vst [vmem:[%s172 + $0x70] sm:$0xff] %v250
      %267 = vst [vmem:[%s172 + $0x78] sm:$0xff] %v251
      %s268 = smul.u32 16, %s14
      %p269 = scmp.lt.s32.totalorder %s268, 63
      %s270 = scalar_select %p269, %s268, 63
      %s271 = smul.addr %s270, 8
      %s272 = scalar_lea.vmem %s3, %s271
      // Predicated region
      $region33: #{double_conv.5} parent=31 // pred_check
        %p273 = pneg %p100
      $region34: #{double_conv.5} parent=31 // pred_check_branch
        %275 = sbr.rel (%p273) target = $region36
      $region35: #{double_conv.5} parent=31 // pred_region
        %s276 = smul.u32 16, %s14
      $region36: #{double_conv.5} parent=31 // pred_fallthru
        _
    $region32: #{double_conv.5} parent=5 // pred_fallthru
      _
    %p277 = scmp.le.s32.totalorder 2, %s9
    // Predicated region
    $region37: #{double_conv.5} parent=5 // pred_check
      %p278 = pneg %p277
    $region38: #{double_conv.5} parent=5 // pred_check_branch
      %280 = sbr.rel (%p278) target = $region40
    $region39: #{double_conv.5} parent=5 // pred_region
      %s281 = ssub.s32 %s9, 2
      // Predicated region
      $region41: #{double_conv.5} parent=39 // pred_check
        %p282 = pneg %p106
      $region42: #{double_conv.5} parent=39 // pred_check_branch
        %284 = sbr.rel (%p282) target = $region44
      $region43: #{double_conv.5} parent=39 // pred_region
        %s285 = smul.u32 16, %s15
        %p286 = scmp.lt.s32.totalorder %s285, 63
        %s287 = scalar_select %p286, %s285, 63
        %s288 = smul.addr %s287, 8
        %s289 = scalar_lea.vmem %s3, %s288
      $region44: #{double_conv.5} parent=39 // pred_fallthru
        _
    $region40: #{double_conv.5} parent=5 // pred_fallthru
      _
  $region6: #{double_conv.5} parent=0 // loop_footer
    %s13 = sadd.s32 1, %s9
  $region7: #{double_conv.5} parent=0 // loop_footer_branch
    %8 = sbr.rel target = $region3
  $region8: #{double_conv.5} parent=0 // loop_exit
    _

// kernel: double_conv.4
$region0: #{double_conv.4}
  #allocation0 [shape = 'u32[]', space=smem, size = 0x4, offset = 0x4, fixed_abs, tag = 'smem constant byte address 0x4 - core index']
  #allocation1 [shape = 'u32[144,128]{1,0:T(1,128)}', space=vmem, size = 0x12000, scoped, tag = 'internal scratch']
  %s0 = inlined_call_operand.vmem [shape: f32[4,10,16,12], index: 0, kind: input, shape index: {}]
  %s1 = inlined_call_operand.vmem [shape: f32[3,12,128], index: 1, kind: input, shape index: {}]
  %s2 = inlined_call_operand.vmem [shape: f32[4,128,128], index: 2, kind: output, shape index: {0}]
  %s3 = inlined_call_operand.vmem [shape: f32[4,1,128], index: 3, kind: output, shape index: {1}]
  %s4 = inlined_call_operand.vmem [shape: f32[4,1,128], index: 4, kind: output, shape index: {2}]
  %5 = xla_tuple %s2, %s3, %s4
  %s6 = sld [smem:[#allocation0]]
  $region57: #{double_conv.4} parent=0
    _
  %s8 = ssub.s32 1, %s6
  %s9 = scalar_select 0, %s8, %s6
  loop: start=0, step=1, limit=6
  $region2: #{double_conv.4} parent=0 // loop_pre_header
    _
  $region3: #{double_conv.4} parent=0 // loop_header
    %s11 = sphi 0, %s15
    %p12 = scmp.ge.s32.totalorder %s11, 6
    %s21 = sphi 0, %s23
    %s24 = sphi 0, %s21
    %s25 = sphi 0, %s24
    %s41 = sphi 0, %s25
    %s45 = sphi 0, %s45
    %s47 = sphi 0, %s45
    %s48 = sphi 0, %s47
    %s62 = sphi 0, %s48
    %s68 = sphi 0, %s70
    %s71 = sphi 0, %s68
    %s72 = sphi 0, %s71
    %s88 = sphi 0, %s72
    %s94 = sphi 0, %s96
    %s97 = sphi 0, %s94
    %s98 = sphi 0, %s97
    %s114 = sphi 0, %s98
    %s120 = sphi 0, %s122
    %s123 = sphi 0, %s120
    %s124 = sphi 0, %s123
    %s140 = sphi 0, %s124
  $region4: #{double_conv.4} parent=0 // loop_header_branch
    %14 = sbr.rel (%p12) target = $region8
  $region5: #{double_conv.4} parent=0 // loop_body
    %s16 = ssub.s32 %s11, 1
    %s17 = ssub.s32 %s11, 2
    %s18 = sadd.s32 %s11, 1
    %s19 = ssub.s32 %s11, %s18
    %p20 = scmp.eq.s32.totalorder %s19, 0
    %s22 = sadd.s32 %s21, 1
    %s23 = scalar_select %p20, %s21, %s22
    %p26 = pneg %p20
    %p27 = scmp.eq.s32.totalorder %s11, 3
    %p28 = por %p26, %p27
    %p29 = scmp.ne.s32.totalorder %s21, %s24
    %p30 = scmp.eq.s32.totalorder %s11, 0
    %p31 = por %p29, %p30
    %p32 = scmp.ne.s32.totalorder %s21, %s24
    %p33 = scmp.eq.s32.totalorder %s16, 3
    %p34 = por %p32, %p33
    %p35 = scmp.ne.s32.totalorder %s24, %s25
    %p36 = scmp.eq.s32.totalorder %s16, 0
    %p37 = por %p35, %p36
    %p38 = scmp.ne.s32.totalorder %s24, %s25
    %p39 = scmp.eq.s32.totalorder %s17, 3
    %p40 = por %p38, %p39
    %p42 = scmp.ne.s32.totalorder %s25, %s41
    %p43 = scmp.eq.s32.totalorder %s17, 0
    %p44 = por %p42, %p43
    %s46 = sadd.s32 %s45, 1
    %p49 = scmp.eq.s32.totalorder %s11, 3
    %p50 = scmp.ne.s32.totalorder %s45, %s47
    %p51 = scmp.eq.s32.totalorder %s11, 0
    %p52 = por %p50, %p51
    %p53 = scmp.ne.s32.totalorder %s45, %s47
    %p54 = scmp.eq.s32.totalorder %s16, 3
    %p55 = por %p53, %p54
    %p56 = scmp.ne.s32.totalorder %s47, %s48
    %p57 = scmp.eq.s32.totalorder %s16, 0
    %p58 = por %p56, %p57
    %p59 = scmp.ne.s32.totalorder %s47, %s48
    %p60 = scmp.eq.s32.totalorder %s17, 3
    %p61 = por %p59, %p60
    %p63 = scmp.ne.s32.totalorder %s48, %s62
    %p64 = scmp.eq.s32.totalorder %s17, 0
    %p65 = por %p63, %p64
    %s66 = ssub.s32 %s11, %s18
    %p67 = scmp.eq.s32.totalorder %s66, 0
    %s69 = sadd.s32 %s68, 1
    %s70 = scalar_select %p67, %s68, %s69
    %p73 = pneg %p67
    %p74 = scmp.eq.s32.totalorder %s11, 3
    %p75 = por %p73, %p74
    %p76 = scmp.ne.s32.totalorder %s68, %s71
    %p77 = scmp.eq.s32.totalorder %s11, 0
    %p78 = por %p76, %p77
    %p79 = scmp.ne.s32.totalorder %s68, %s71
    %p80 = scmp.eq.s32.totalorder %s16, 3
    %p81 = por %p79, %p80
    %p82 = scmp.ne.s32.totalorder %s71, %s72
    %p83 = scmp.eq.s32.totalorder %s16, 0
    %p84 = por %p82, %p83
    %p85 = scmp.ne.s32.totalorder %s71, %s72
    %p86 = scmp.eq.s32.totalorder %s17, 3
    %p87 = por %p85, %p86
    %p89 = scmp.ne.s32.totalorder %s72, %s88
    %p90 = scmp.eq.s32.totalorder %s17, 0
    %p91 = por %p89, %p90
    %s92 = ssub.s32 %s11, %s18
    %p93 = scmp.eq.s32.totalorder %s92, 0
    %s95 = sadd.s32 %s94, 1
    %s96 = scalar_select %p93, %s94, %s95
    %p99 = pneg %p93
    %p100 = scmp.eq.s32.totalorder %s11, 3
    %p101 = por %p99, %p100
    %p102 = scmp.ne.s32.totalorder %s94, %s97
    %p103 = scmp.eq.s32.totalorder %s11, 0
    %p104 = por %p102, %p103
    %p105 = scmp.ne.s32.totalorder %s94, %s97
    %p106 = scmp.eq.s32.totalorder %s16, 3
    %p107 = por %p105, %p106
    %p108 = scmp.ne.s32.totalorder %s97, %s98
    %p109 = scmp.eq.s32.totalorder %s16, 0
    %p110 = por %p108, %p109
    %p111 = scmp.ne.s32.totalorder %s97, %s98
    %p112 = scmp.eq.s32.totalorder %s17, 3
    %p113 = por %p111, %p112
    %p115 = scmp.ne.s32.totalorder %s98, %s114
    %p116 = scmp.eq.s32.totalorder %s17, 0
    %p117 = por %p115, %p116
    %s118 = ssub.s32 %s11, %s18
    %p119 = scmp.eq.s32.totalorder %s118, 0
    %s121 = sadd.s32 %s120, 1
    %s122 = scalar_select %p119, %s120, %s121
    %p125 = pneg %p119
    %p126 = scmp.eq.s32.totalorder %s11, 3
    %p127 = por %p125, %p126
    %p128 = scmp.ne.s32.totalorder %s120, %s123
    %p129 = scmp.eq.s32.totalorder %s11, 0
    %p130 = por %p128, %p129
    %p131 = scmp.ne.s32.totalorder %s120, %s123
    %p132 = scmp.eq.s32.totalorder %s16, 3
    %p133 = por %p131, %p132
    %p134 = scmp.ne.s32.totalorder %s123, %s124
    %p135 = scmp.eq.s32.totalorder %s16, 0
    %p136 = por %p134, %p135
    %p137 = scmp.ne.s32.totalorder %s123, %s124
    %p138 = scmp.eq.s32.totalorder %s17, 3
    %p139 = por %p137, %p138
    %p141 = scmp.ne.s32.totalorder %s124, %s140
    %p142 = scmp.eq.s32.totalorder %s17, 0
    %p143 = por %p141, %p142
    %p144 = scmp.le.s32.totalorder 1, %s11
    %p145 = scmp.lt.s32.totalorder %s11, 5
    %p146 = pnand %p144, %p145
    %p147 = pneg %p146
    // Predicated region
    $region9: #{double_conv.4} parent=5 // pred_check
      _
    $region10: #{double_conv.4} parent=5 // pred_check_branch
      %149 = sbr.rel (%p146) target = $region12
    $region11: #{double_conv.4} parent=5 // pred_region
      %s150 = ssub.s32 %s11, 1
      // Predicated region
      $region13: #{double_conv.4} parent=11 // pred_check
        %p151 = pneg %p58
      $region14: #{double_conv.4} parent=11 // pred_check_branch
        %153 = sbr.rel (%p151) target = $region16
      $region15: #{double_conv.4} parent=11 // pred_region
        _
      $region16: #{double_conv.4} parent=11 // pred_fallthru
        _
    $region12: #{double_conv.4} parent=5 // pred_fallthru
      _
    %p154 = scmp.lt.s32.totalorder %s11, 4
    // Predicated region
    $region17: #{double_conv.4} parent=5 // pred_check
      %p155 = pneg %p154
    $region18: #{double_conv.4} parent=5 // pred_check_branch
      %157 = sbr.rel (%p155) target = $region20
    $region19: #{double_conv.4} parent=5 // pred_region
      // Predicated region
      $region21: #{double_conv.4} parent=19 // pred_check
        %p158 = pneg %p31
      $region22: #{double_conv.4} parent=19 // pred_check_branch
        %160 = sbr.rel (%p158) target = $region24
      $region23: #{double_conv.4} parent=19 // pred_region
        %p161 = scmp.lt.s32.totalorder %s11, 3
        %s162 = scalar_select %p161, %s11, 3
        %s163 = smul.addr %s162, 20
        %s164 = smul.addr %s163, 8
        %s165 = scalar_lea.vmem %s0, %s164
      $region24: #{double_conv.4} parent=19 // pred_fallthru
        _
    $region20: #{double_conv.4} parent=5 // pred_fallthru
      _
    %p166 = scmp.le.s32.totalorder 1, %s11
    %p167 = scmp.lt.s32.totalorder %s11, 5
    %p168 = pnand %p166, %p167
    %p169 = pneg %p168
    // Predicated region
    $region25: #{double_conv.4} parent=5 // pred_check
      _
    $region26: #{double_conv.4} parent=5 // pred_check_branch
      %171 = sbr.rel (%p168) target = $region28
    $region27: #{double_conv.4} parent=5 // pred_region
      %s172 = ssub.s32 %s11, 1
      %p173 = scmp.lt.s32.totalorder %s16, 3
      %s174 = scalar_select %p173, %s16, 3
      %s175 = smul.addr %s174, 20
      %s176 = smul.addr %s175, 8
      %s177 = scalar_lea.vmem %s0, %s176
      %p178 = pneg %p37
      %p179 = pneg %p34
      %p180 = pneg %p58
      %p181 = pneg %p55
      %p182 = pneg %p84
      %p183 = pneg %p81
      %p184 = scmp.lt.s32.totalorder %s16, 3
      %s185 = scalar_select %p184, %s16, 3
      %s186 = smul.addr %s185, 16
      %s187 = smul.addr %s186, 8
      %s188 = scalar_lea.vmem %s2, %s187
      %p189 = pneg %p110
      %p190 = pneg %p107
      %p191 = scmp.lt.s32.totalorder %s16, 3
      %s192 = scalar_select %p191, %s16, 3
      %s193 = scalar_lea.vmem %s3, %s192
      %p194 = pneg %p136
      %p195 = pneg %p133
      %p196 = scmp.lt.s32.totalorder %s16, 3
      %s197 = scalar_select %p196, %s16, 3
      %s198 = scalar_lea.vmem %s4, %s197
      %p199 = scmp.lt.s32.totalorder %s16, 3
      %s200 = scalar_select %p199, %s16, 3
      %s201 = smul.addr %s200, 20
      %s202 = smul.addr %s201, 8
      %s203 = scalar_lea.vmem %s0, %s202
      %p204 = scmp.lt.s32.totalorder %s16, 3
      %s205 = scalar_select %p204, %s16, 3
      %s206 = smul.addr %s205, 16
      %s207 = smul.addr %s206, 8
      %s208 = scalar_lea.vmem %s2, %s207
      %p209 = scmp.lt.s32.totalorder %s16, 3
      %s210 = scalar_select %p209, %s16, 3
      %s211 = scalar_lea.vmem %s3, %s210
      %p212 = scmp.lt.s32.totalorder %s16, 3
      %s213 = scalar_select %p212, %s16, 3
      %s214 = scalar_lea.vmem %s4, %s213
      %v215 = vld [vmem:[%s203] sm:$0xff]
      %v216 = vld [vmem:[%s203 + $0x8] sm:$0xff]
      %v217 = vld [vmem:[%s203 + $0x10] sm:$0xff]
      %v218 = vld [vmem:[%s203 + $0x18] sm:$0xff]
      %v219 = vld [vmem:[%s203 + $0x20] sm:$0xff]
      %v220 = vld [vmem:[%s203 + $0x28] sm:$0xff]
      %v221 = vld [vmem:[%s203 + $0x30] sm:$0xff]
      %v222 = vld [vmem:[%s203 + $0x38] sm:$0xff]
      %v223 = vld [vmem:[%s203 + $0x40] sm:$0xff]
      %v224 = vld [vmem:[%s203 + $0x48] sm:$0xff]
      %v225 = vld [vmem:[%s203 + $0x50] sm:$0xff]
      %v226 = vld [vmem:[%s203 + $0x58] sm:$0xff]
      %v227 = vld [vmem:[%s203 + $0x60] sm:$0xff]
      %v228 = vld [vmem:[%s203 + $0x68] sm:$0xff]
      %v229 = vld [vmem:[%s203 + $0x70] sm:$0xff]
      %v230 = vld [vmem:[%s203 + $0x78] sm:$0xff]
      %v231 = vld [vmem:[%s1] sm:$0xff]
      %v232 = vld [vmem:[%s1 + $0x8] sm:$0xf]
      %s233 = scalar_lea.vmem %s203, 16
      %v234 = vld [vmem:[%s233] sm:$0xff]
      %v235 = vld [vmem:[%s233 + $0x8] sm:$0xff]
      %v236 = vld [vmem:[%s233 + $0x10] sm:$0xff]
      %v237 = vld [vmem:[%s233 + $0x18] sm:$0xff]
      %v238 = vld [vmem:[%s233 + $0x20] sm:$0xff]
      %v239 = vld [vmem:[%s233 + $0x28] sm:$0xff]
      %v240 = vld [vmem:[%s233 + $0x30] sm:$0xff]
      %v241 = vld [vmem:[%s233 + $0x38] sm:$0xff]
      %v242 = vld [vmem:[%s233 + $0x40] sm:$0xff]
      %v243 = vld [vmem:[%s233 + $0x48] sm:$0xff]
      %v244 = vld [vmem:[%s233 + $0x50] sm:$0xff]
      %v245 = vld [vmem:[%s233 + $0x58] sm:$0xff]
      %v246 = vld [vmem:[%s233 + $0x60] sm:$0xff]
      %v247 = vld [vmem:[%s233 + $0x68] sm:$0xff]
      %v248 = vld [vmem:[%s233 + $0x70] sm:$0xff]
      %v249 = vld [vmem:[%s233 + $0x78] sm:$0xff]
      %s250 = scalar_lea.vmem %s1, 16
      %v251 = vld [vmem:[%s250] sm:$0xff]
      %v252 = vld [vmem:[%s250 + $0x8] sm:$0xf]
      %vm253 = vcmask 97280
      %v255 = vsel %vm253, %v234, 0
      %v258 = vsel %vm253, %v235, 0
      %v261 = vsel %vm253, %v236, 0
      %v264 = vsel %vm253, %v237, 0
      %v267 = vsel %vm253, %v238, 0
      %v270 = vsel %vm253, %v239, 0
      %v273 = vsel %vm253, %v240, 0
      %v276 = vsel %vm253, %v241, 0
      %v279 = vsel %vm253, %v242, 0
      %v282 = vsel %vm253, %v243, 0
      %v285 = vsel %vm253, %v244, 0
      %v288 = vsel %vm253, %v245, 0
      %v291 = vsel %vm253, %v246, 0
      %v294 = vsel %vm253, %v247, 0
      %v297 = vsel %vm253, %v248, 0
      %v300 = vsel %vm253, %v249, 0
      %vm302 = vcmask 1043456
      %v304 = vsel %vm302, %v252, 0
      %306 = vmatprep.subr.mxu0 0.0
      %307 = vmatpush1.msra.mxu0 0.0
      %308 = vmatprep.subr.mxu0 0.0
      %309 = vmatpush1.msra.mxu0 0.0
      %310 = vmatprep.subr.mxu0 0.0
      %311 = vmatpush1.msra.mxu0 0.0
      %312 = vmatprep.subr.mxu0 0.0
      %313 = vmatpush1.msra.mxu0 0.0
      %314 = vmatprep.subr.mxu0 0.0
      %315 = vmatpush1.msra.mxu0 0.0
      %316 = vmatprep.subr.mxu0 0.0
      %317 = vmatpush1.msra.mxu0 0.0
      %318 = vmatprep.subr.mxu0 0.0
      %319 = vmatpush1.msra.mxu0 0.0
      %320 = vmatprep.subr.mxu0 0.0
      %321 = vmatpush1.msra.mxu0 0.0
      %322 = vmatprep.subr.mxu0 0.0
      %323 = vmatpush1.msra.mxu0 0.0
      %324 = vmatprep.subr.mxu0 0.0
      %325 = vmatpush1.msra.mxu0 0.0
      %326 = vmatprep.subr.mxu0 0.0
      %327 = vmatpush1.msra.mxu0 0.0
      %328 = vmatprep.subr.mxu0 0.0
      %329 = vmatpush1.msra.mxu0 0.0
      %330 = vmatprep.subr.mxu0 0.0
      %331 = vmatpush1.msra.mxu0 0.0
      %332 = vmatprep.subr.mxu0 0.0
      %333 = vmatpush1.msra.mxu0 0.0
      %334 = vmatprep.subr.mxu0 0.0
      %335 = vmatpush1.msra.mxu0 %v304
      %336 = vmatprep.subr.mxu0 0.0
      %337 = vmatpush1.msra.mxu0 %v251
      %338 = vmatprep.subr.mxu0 0.0
      %339 = vmatpush2.msra.mxu0 0.0
      %340 = vmatprep.subr.mxu0 0.0
      %341 = vmatpush2.msra.mxu0 0.0
      %342 = vmatprep.subr.mxu0 0.0
      %343 = vmatpush2.msra.mxu0 0.0
      %344 = vmatprep.subr.mxu0 0.0
      %345 = vmatpush2.msra.mxu0 0.0
      %346 = vmatprep.subr.mxu0 0.0
      %347 = vmatpush2.msra.mxu0 0.0
      %348 = vmatprep.subr.mxu0 0.0
      %349 = vmatpush2.msra.mxu0 0.0
      %350 = vmatprep.subr.mxu0 0.0
      %351 = vmatpush2.msra.mxu0 0.0
      %352 = vmatprep.subr.mxu0 0.0
      %353 = vmatpush2.msra.mxu0 0.0
      %354 = vmatprep.subr.mxu0 0.0
      %355 = vmatpush2.msra.mxu0 0.0
      %356 = vmatprep.subr.mxu0 0.0
      %357 = vmatpush2.msra.mxu0 0.0
      %358 = vmatprep.subr.mxu0 0.0
      %359 = vmatpush2.msra.mxu0 0.0
      %360 = vmatprep.subr.mxu0 0.0
      %361 = vmatpush2.msra.mxu0 0.0
      %362 = vmatprep.subr.mxu0 0.0
      %363 = vmatpush2.msra.mxu0 0.0
      %364 = vmatprep.subr.mxu0 0.0
      %365 = vmatpush2.msra.mxu0 0.0
      %366 = vmatprep.subr.mxu0 0.0
      %367 = vmatpush2.msra.mxu0 0.0
      %368 = vmatprep.subr.mxu0 0.0
      %369 = vmatpush2.msra.mxu0 0.0
      %370 = vmatprep.mubr.f32.mxu0 0.0
      %371 = vmatmul.mubr.f32.gmra.mxu0 %v255
      %v372 = vpop.f32.mrf.mxu0
      %v373 = vadd.f32 0.0, %v372
      %v374 = vpop.f32.mrf.mxu0
      %375 = vmatprep.mubr.f32.mxu0 0.0
      %376 = vmatmul.mubr.f32.gmra.mxu0 %v258
      %v377 = vpop.f32.mrf.mxu0
      %v378 = vadd.f32 0.0, %v377
      %v379 = vpop.f32.mrf.mxu0
      %380 = vmatprep.mubr.f32.mxu0 0.0
      %381 = vmatmul.mubr.f32.gmra.mxu0 %v261
      %v382 = vpop.f32.mrf.mxu0
      %v383 = vadd.f32 0.0, %v382
      %v384 = vpop.f32.mrf.mxu0
      %385 = vmatprep.mubr.f32.mxu0 0.0
      %386 = vmatmul.mubr.f32.gmra.mxu0 %v264
      %v387 = vpop.f32.mrf.mxu0
      %v388 = vadd.f32 0.0, %v387
      %v389 = vpop.f32.mrf.mxu0
      %390 = vmatprep.mubr.f32.mxu0 0.0
      %391 = vmatmul.mubr.f32.gmra.mxu0 %v267
      %v392 = vpop.f32.mrf.mxu0
      %v393 = vadd.f32 0.0, %v392
      %v394 = vpop.f32.mrf.mxu0
      %395 = vmatprep.mubr.f32.mxu0 0.0
      %396 = vmatmul.mubr.f32.gmra.mxu0 %v270
      %v397 = vpop.f32.mrf.mxu0
      %v398 = vadd.f32 0.0, %v397
      %v399 = vpop.f32.mrf.mxu0
      %400 = vmatprep.mubr.f32.mxu0 0.0
      %401 = vmatmul.mubr.f32.gmra.mxu0 %v273
      %v402 = vpop.f32.mrf.mxu0
      %v403 = vadd.f32 0.0, %v402
      %v404 = vpop.f32.mrf.mxu0
      %405 = vmatprep.mubr.f32.mxu0 0.0
      %406 = vmatmul.mubr.f32.gmra.mxu0 %v276
      %v407 = vpop.f32.mrf.mxu0
      %v408 = vadd.f32 0.0, %v407
      %v409 = vpop.f32.mrf.mxu0
      %410 = vmatprep.mubr.f32.mxu0 0.0
      %411 = vmatmul.mubr.f32.gmra.mxu0 %v279
      %v412 = vpop.f32.mrf.mxu0
      %v413 = vadd.f32 0.0, %v412
      %v414 = vpop.f32.mrf.mxu0
      %415 = vmatprep.mubr.f32.mxu0 0.0
      %416 = vmatmul.mubr.f32.gmra.mxu0 %v282
      %v417 = vpop.f32.mrf.mxu0
      %v418 = vadd.f32 0.0, %v417
      %v419 = vpop.f32.mrf.mxu0
      %420 = vmatprep.mubr.f32.mxu0 0.0
      %421 = vmatmul.mubr.f32.gmra.mxu0 %v285
      %v422 = vpop.f32.mrf.mxu0
      %v423 = vadd.f32 0.0, %v422
      %v424 = vpop.f32.mrf.mxu0
      %425 = vmatprep.mubr.f32.mxu0 0.0
      %426 = vmatmul.mubr.f32.gmra.mxu0 %v288
      %v427 = vpop.f32.mrf.mxu0
      %v428 = vadd.f32 0.0, %v427
      %v429 = vpop.f32.mrf.mxu0
      %430 = vmatprep.mubr.f32.mxu0 0.0
      %431 = vmatmul.mubr.f32.gmra.mxu0 %v291
      %v432 = vpop.f32.mrf.mxu0
      %v433 = vadd.f32 0.0, %v432
      %v434 = vpop.f32.mrf.mxu0
      %435 = vmatprep.mubr.f32.mxu0 0.0
      %436 = vmatmul.mubr.f32.gmra.mxu0 %v294
      %v437 = vpop.f32.mrf.mxu0
      %v438 = vadd.f32 0.0, %v437
      %v439 = vpop.f32.mrf.mxu0
      %440 = vmatprep.mubr.f32.mxu0 0.0
      %441 = vmatmul.mubr.f32.gmra.mxu0 %v297
      %v442 = vpop.f32.mrf.mxu0
      %v443 = vadd.f32 0.0, %v442
      %v444 = vpop.f32.mrf.mxu0
      %445 = vmatprep.mubr.f32.mxu0 0.0
      %446 = vmatmul.mubr.f32.gmra.mxu0 %v300
      %v447 = vpop.f32.mrf.mxu0
      %v448 = vadd.f32 0.0, %v447
      %v449 = vpop.f32.mrf.mxu0
      %450 = vdwg.mxu0
      %v452 = vsel %vm253, %v215, 0
      %v455 = vsel %vm253, %v216, 0
      %v458 = vsel %vm253, %v217, 0
      %v461 = vsel %vm253, %v218, 0
      %v464 = vsel %vm253, %v219, 0
      %v467 = vsel %vm253, %v220, 0
      %v470 = vsel %vm253, %v221, 0
      %v473 = vsel %vm253, %v222, 0
      %v476 = vsel %vm253, %v223, 0
      %v479 = vsel %vm253, %v224, 0
      %v482 = vsel %vm253, %v225, 0
      %v485 = vsel %vm253, %v226, 0
      %v488 = vsel %vm253, %v227, 0
      %v491 = vsel %vm253, %v228, 0
      %v494 = vsel %vm253, %v229, 0
      %v497 = vsel %vm253, %v230, 0
      %v500 = vsel %vm302, %v232, 0
      %502 = vmatprep.subr.mxu0 0.0
      %503 = vmatpush1.msra.mxu0 0.0
      %504 = vmatprep.subr.mxu0 0.0
      %505 = vmatpush1.msra.mxu0 0.0
      %506 = vmatprep.subr.mxu0 0.0
      %507 = vmatpush1.msra.mxu0 0.0
      %508 = vmatprep.subr.mxu0 0.0
      %509 = vmatpush1.msra.mxu0 0.0
      %510 = vmatprep.subr.mxu0 0.0
      %511 = vmatpush1.msra.mxu0 0.0
      %512 = vmatprep.subr.mxu0 0.0
      %513 = vmatpush1.msra.mxu0 0.0
      %514 = vmatprep.subr.mxu0 0.0
      %515 = vmatpush1.msra.mxu0 0.0
      %516 = vmatprep.subr.mxu0 0.0
      %517 = vmatpush1.msra.mxu0 0.0
      %518 = vmatprep.subr.mxu0 0.0
      %519 = vmatpush1.msra.mxu0 0.0
      %520 = vmatprep.subr.mxu0 0.0
      %521 = vmatpush1.msra.mxu0 0.0
      %522 = vmatprep.subr.mxu0 0.0
      %523 = vmatpush1.msra.mxu0 0.0
      %524 = vmatprep.subr.mxu0 0.0
      %525 = vmatpush1.msra.mxu0 0.0
      %526 = vmatprep.subr.mxu0 0.0
      %527 = vmatpush1.msra.mxu0 0.0
      %528 = vmatprep.subr.mxu0 0.0
      %529 = vmatpush1.msra.mxu0 0.0
      %530 = vmatprep.subr.mxu0 0.0
      %531 = vmatpush1.msra.mxu0 %v500
      %532 = vmatprep.subr.mxu0 0.0
      %533 = vmatpush1.msra.mxu0 %v231
      %534 = vmatprep.subr.mxu0 0.0
      %535 = vmatpush2.msra.mxu0 0.0
      %536 = vmatprep.subr.mxu0 0.0
      %537 = vmatpush2.msra.mxu0 0.0
      %538 = vmatprep.subr.mxu0 0.0
      %539 = vmatpush2.msra.mxu0 0.0
      %540 = vmatprep.subr.mxu0 0.0
      %541 = vmatpush2.msra.mxu0 0.0
      %542 = vmatprep.subr.mxu0 0.0
      %543 = vmatpush2.msra.mxu0 0.0
      %544 = vmatprep.subr.mxu0 0.0
      %545 = vmatpush2.msra.mxu0 0.0
      %546 = vmatprep.subr.mxu0 0.0
      %547 = vmatpush2.msra.mxu0 0.0
      %548 = vmatprep.subr.mxu0 0.0
      %549 = vmatpush2.msra.mxu0 0.0
      %550 = vmatprep.subr.mxu0 0.0
      %551 = vmatpush2.msra.mxu0 0.0
      %552 = vmatprep.subr.mxu0 0.0
      %553 = vmatpush2.msra.mxu0 0.0
      %554 = vmatprep.subr.mxu0 0.0
      %555 = vmatpush2.msra.mxu0 0.0
      %556 = vmatprep.subr.mxu0 0.0
      %557 = vmatpush2.msra.mxu0 0.0
      %558 = vmatprep.subr.mxu0 0.0
      %559 = vmatpush2.msra.mxu0 0.0
      %560 = vmatprep.subr.mxu0 0.0
      %561 = vmatpush2.msra.mxu0 0.0
      %562 = vmatprep.subr.mxu0 0.0
      %563 = vmatpush2.msra.mxu0 0.0
      %564 = vmatprep.subr.mxu0 0.0
      %565 = vmatpush2.msra.mxu0 0.0
      %566 = vmatprep.mubr.f32.mxu0 0.0
      %567 = vmatmul.mubr.f32.gmra.mxu0 %v452
      %v568 = vpop.f32.mrf.mxu0
      %v569 = vadd.f32 %v373, %v568
      %v570 = vpop.f32.mrf.mxu0
      %571 = vmatprep.mubr.f32.mxu0 0.0
      %572 = vmatmul.mubr.f32.gmra.mxu0 %v455
      %v573 = vpop.f32.mrf.mxu0
      %v574 = vadd.f32 %v378, %v573
      %v575 = vpop.f32.mrf.mxu0
      %576 = vmatprep.mubr.f32.mxu0 0.0
      %577 = vmatmul.mubr.f32.gmra.mxu0 %v458
      %v578 = vpop.f32.mrf.mxu0
      %v579 = vadd.f32 %v383, %v578
      %v580 = vpop.f32.mrf.mxu0
      %581 = vmatprep.mubr.f32.mxu0 0.0
      %582 = vmatmul.mubr.f32.gmra.mxu0 %v461
      %v583 = vpop.f32.mrf.mxu0
      %v584 = vadd.f32 %v388, %v583
      %v585 = vpop.f32.mrf.mxu0
      %586 = vmatprep.mubr.f32.mxu0 0.0
      %587 = vmatmul.mubr.f32.gmra.mxu0 %v464
      %v588 = vpop.f32.mrf.mxu0
      %v589 = vadd.f32 %v393, %v588
      %v590 = vpop.f32.mrf.mxu0
      %591 = vmatprep.mubr.f32.mxu0 0.0
      %592 = vmatmul.mubr.f32.gmra.mxu0 %v467
      %v593 = vpop.f32.mrf.mxu0
      %v594 = vadd.f32 %v398, %v593
      %v595 = vpop.f32.mrf.mxu0
      %596 = vmatprep.mubr.f32.mxu0 0.0
      %597 = vmatmul.mubr.f32.gmra.mxu0 %v470
      %v598 = vpop.f32.mrf.mxu0
      %v599 = vadd.f32 %v403, %v598
      %v600 = vpop.f32.mrf.mxu0
      %601 = vmatprep.mubr.f32.mxu0 0.0
      %602 = vmatmul.mubr.f32.gmra.mxu0 %v473
      %v603 = vpop.f32.mrf.mxu0
      %v604 = vadd.f32 %v408, %v603
      %v605 = vpop.f32.mrf.mxu0
      %606 = vmatprep.mubr.f32.mxu0 0.0
      %607 = vmatmul.mubr.f32.gmra.mxu0 %v476
      %v608 = vpop.f32.mrf.mxu0
      %v609 = vadd.f32 %v413, %v608
      %v610 = vpop.f32.mrf.mxu0
      %611 = vmatprep.mubr.f32.mxu0 0.0
      %612 = vmatmul.mubr.f32.gmra.mxu0 %v479
      %v613 = vpop.f32.mrf.mxu0
      %v614 = vadd.f32 %v418, %v613
      %v615 = vpop.f32.mrf.mxu0
      %616 = vmatprep.mubr.f32.mxu0 0.0
      %617 = vmatmul.mubr.f32.gmra.mxu0 %v482
      %v618 = vpop.f32.mrf.mxu0
      %v619 = vadd.f32 %v423, %v618
      %v620 = vpop.f32.mrf.mxu0
      %621 = vmatprep.mubr.f32.mxu0 0.0
      %622 = vmatmul.mubr.f32.gmra.mxu0 %v485
      %v623 = vpop.f32.mrf.mxu0
      %v624 = vadd.f32 %v428, %v623
      %v625 = vpop.f32.mrf.mxu0
      %626 = vmatprep.mubr.f32.mxu0 0.0
      %627 = vmatmul.mubr.f32.gmra.mxu0 %v488
      %v628 = vpop.f32.mrf.mxu0
      %v629 = vadd.f32 %v433, %v628
      %v630 = vpop.f32.mrf.mxu0
      %631 = vmatprep.mubr.f32.mxu0 0.0
      %632 = vmatmul.mubr.f32.gmra.mxu0 %v491
      %v633 = vpop.f32.mrf.mxu0
      %v634 = vadd.f32 %v438, %v633
      %v635 = vpop.f32.mrf.mxu0
      %636 = vmatprep.mubr.f32.mxu0 0.0
      %637 = vmatmul.mubr.f32.gmra.mxu0 %v494
      %v638 = vpop.f32.mrf.mxu0
      %v639 = vadd.f32 %v443, %v638
      %v640 = vpop.f32.mrf.mxu0
      %641 = vmatprep.mubr.f32.mxu0 0.0
      %642 = vmatmul.mubr.f32.gmra.mxu0 %v497
      %v643 = vpop.f32.mrf.mxu0
      %v644 = vadd.f32 %v448, %v643
      %v645 = vpop.f32.mrf.mxu0
      %646 = vdwg.mxu0
      %s647 = scalar_lea.vmem %s203, 32
      %v648 = vld [vmem:[%s647] sm:$0xff]
      %v649 = vld [vmem:[%s647 + $0x8] sm:$0xff]
      %v650 = vld [vmem:[%s647 + $0x10] sm:$0xff]
      %v651 = vld [vmem:[%s647 + $0x18] sm:$0xff]
      %v652 = vld [vmem:[%s647 + $0x20] sm:$0xff]
      %v653 = vld [vmem:[%s647 + $0x28] sm:$0xff]
      %v654 = vld [vmem:[%s647 + $0x30] sm:$0xff]
      %v655 = vld [vmem:[%s647 + $0x38] sm:$0xff]
      %v656 = vld [vmem:[%s647 + $0x40] sm:$0xff]
      %v657 = vld [vmem:[%s647 + $0x48] sm:$0xff]
      %v658 = vld [vmem:[%s647 + $0x50] sm:$0xff]
      %v659 = vld [vmem:[%s647 + $0x58] sm:$0xff]
      %v660 = vld [vmem:[%s647 + $0x60] sm:$0xff]
      %v661 = vld [vmem:[%s647 + $0x68] sm:$0xff]
      %v662 = vld [vmem:[%s647 + $0x70] sm:$0xff]
      %v663 = vld [vmem:[%s647 + $0x78] sm:$0xff]
      %s664 = scalar_lea.vmem %s1, 32
      %v665 = vld [vmem:[%s664] sm:$0xff]
      %v666 = vld [vmem:[%s664 + $0x8] sm:$0xf]
      %v668 = vsel %vm253, %v648, 0
      %v671 = vsel %vm253, %v649, 0
      %v674 = vsel %vm253, %v650, 0
      %v677 = vsel %vm253, %v651, 0
      %v680 = vsel %vm253, %v652, 0
      %v683 = vsel %vm253, %v653, 0
      %v686 = vsel %vm253, %v654, 0
      %v689 = vsel %vm253, %v655, 0
      %v692 = vsel %vm253, %v656, 0
      %v695 = vsel %vm253, %v657, 0
      %v698 = vsel %vm253, %v658, 0
      %v701 = vsel %vm253, %v659, 0
      %v704 = vsel %vm253, %v660, 0
      %v707 = vsel %vm253, %v661, 0
      %v710 = vsel %vm253, %v662, 0
      %v713 = vsel %vm253, %v663, 0
      %v716 = vsel %vm302, %v666, 0
      %718 = vmatprep.subr.mxu0 0.0
      %719 = vmatpush1.msra.mxu0 0.0
      %720 = vmatprep.subr.mxu0 0.0
      %721 = vmatpush1.msra.mxu0 0.0
      %722 = vmatprep.subr.mxu0 0.0
      %723 = vmatpush1.msra.mxu0 0.0
      %724 = vmatprep.subr.mxu0 0.0
      %725 = vmatpush1.msra.mxu0 0.0
      %726 = vmatprep.subr.mxu0 0.0
      %727 = vmatpush1.msra.mxu0 0.0
      %728 = vmatprep.subr.mxu0 0.0
      %729 = vmatpush1.msra.mxu0 0.0
      %730 = vmatprep.subr.mxu0 0.0
      %731 = vmatpush1.msra.mxu0 0.0
      %732 = vmatprep.subr.mxu0 0.0
      %733 = vmatpush1.msra.mxu0 0.0
      %734 = vmatprep.subr.mxu0 0.0
      %735 = vmatpush1.msra.mxu0 0.0
      %736 = vmatprep.subr.mxu0 0.0
      %737 = vmatpush1.msra.mxu0 0.0
      %738 = vmatprep.subr.mxu0 0.0
      %739 = vmatpush1.msra.mxu0 0.0
      %740 = vmatprep.subr.mxu0 0.0
      %741 = vmatpush1.msra.mxu0 0.0
      %742 = vmatprep.subr.mxu0 0.0
      %743 = vmatpush1.msra.mxu0 0.0
      %744 = vmatprep.subr.mxu0 0.0
      %745 = vmatpush1.msra.mxu0 0.0
      %746 = vmatprep.subr.mxu0 0.0
      %747 = vmatpush1.msra.mxu0 %v716
      %748 = vmatprep.subr.mxu0 0.0
      %749 = vmatpush1.msra.mxu0 %v665
      %750 = vmatprep.subr.mxu0 0.0
      %751 = vmatpush2.msra.mxu0 0.0
      %752 = vmatprep.subr.mxu0 0.0
      %753 = vmatpush2.msra.mxu0 0.0
      %754 = vmatprep.subr.mxu0 0.0
      %755 = vmatpush2.msra.mxu0 0.0
      %756 = vmatprep.subr.mxu0 0.0
      %757 = vmatpush2.msra.mxu0 0.0
      %758 = vmatprep.subr.mxu0 0.0
      %759 = vmatpush2.msra.mxu0 0.0
      %760 = vmatprep.subr.mxu0 0.0
      %761 = vmatpush2.msra.mxu0 0.0
      %762 = vmatprep.subr.mxu0 0.0
      %763 = vmatpush2.msra.mxu0 0.0
      %764 = vmatprep.subr.mxu0 0.0
      %765 = vmatpush2.msra.mxu0 0.0
      %766 = vmatprep.subr.mxu0 0.0
      %767 = vmatpush2.msra.mxu0 0.0
      %768 = vmatprep.subr.mxu0 0.0
      %769 = vmatpush2.msra.mxu0 0.0
      %770 = vmatprep.subr.mxu0 0.0
      %771 = vmatpush2.msra.mxu0 0.0
      %772 = vmatprep.subr.mxu0 0.0
      %773 = vmatpush2.msra.mxu0 0.0
      %774 = vmatprep.subr.mxu0 0.0
      %775 = vmatpush2.msra.mxu0 0.0
      %776 = vmatprep.subr.mxu0 0.0
      %777 = vmatpush2.msra.mxu0 0.0
      %778 = vmatprep.subr.mxu0 0.0
      %779 = vmatpush2.msra.mxu0 0.0
      %780 = vmatprep.subr.mxu0 0.0
      %781 = vmatpush2.msra.mxu0 0.0
      %782 = vmatprep.mubr.f32.mxu0 0.0
      %783 = vmatmul.mubr.f32.gmra.mxu0 %v668
      %v784 = vpop.f32.mrf.mxu0
      %v785 = vadd.f32 0.0, %v784
      %v786 = vpop.f32.mrf.mxu0
      %787 = vmatprep.mubr.f32.mxu0 0.0
      %788 = vmatmul.mubr.f32.gmra.mxu0 %v671
      %v789 = vpop.f32.mrf.mxu0
      %v790 = vadd.f32 0.0, %v789
      %v791 = vpop.f32.mrf.mxu0
      %792 = vmatprep.mubr.f32.mxu0 0.0
      %793 = vmatmul.mubr.f32.gmra.mxu0 %v674
      %v794 = vpop.f32.mrf.mxu0
      %v795 = vadd.f32 0.0, %v794
      %v796 = vpop.f32.mrf.mxu0
      %797 = vmatprep.mubr.f32.mxu0 0.0
      %798 = vmatmul.mubr.f32.gmra.mxu0 %v677
      %v799 = vpop.f32.mrf.mxu0
      %v800 = vadd.f32 0.0, %v799
      %v801 = vpop.f32.mrf.mxu0
      %802 = vmatprep.mubr.f32.mxu0 0.0
      %803 = vmatmul.mubr.f32.gmra.mxu0 %v680
      %v804 = vpop.f32.mrf.mxu0
      %v805 = vadd.f32 0.0, %v804
      %v806 = vpop.f32.mrf.mxu0
      %807 = vmatprep.mubr.f32.mxu0 0.0
      %808 = vmatmul.mubr.f32.gmra.mxu0 %v683
      %v809 = vpop.f32.mrf.mxu0
      %v810 = vadd.f32 0.0, %v809
      %v811 = vpop.f32.mrf.mxu0
      %812 = vmatprep.mubr.f32.mxu0 0.0
      %813 = vmatmul.mubr.f32.gmra.mxu0 %v686
      %v814 = vpop.f32.mrf.mxu0
      %v815 = vadd.f32 0.0, %v814
      %v816 = vpop.f32.mrf.mxu0
      %817 = vmatprep.mubr.f32.mxu0 0.0
      %818 = vmatmul.mubr.f32.gmra.mxu0 %v689
      %v819 = vpop.f32.mrf.mxu0
      %v820 = vadd.f32 0.0, %v819
      %v821 = vpop.f32.mrf.mxu0
      %822 = vmatprep.mubr.f32.mxu0 0.0
      %823 = vmatmul.mubr.f32.gmra.mxu0 %v692
      %v824 = vpop.f32.mrf.mxu0
      %v825 = vadd.f32 0.0, %v824
      %v826 = vpop.f32.mrf.mxu0
      %827 = vmatprep.mubr.f32.mxu0 0.0
      %828 = vmatmul.mubr.f32.gmra.mxu0 %v695
      %v829 = vpop.f32.mrf.mxu0
      %v830 = vadd.f32 0.0, %v829
      %v831 = vpop.f32.mrf.mxu0
      %832 = vmatprep.mubr.f32.mxu0 0.0
      %833 = vmatmul.mubr.f32.gmra.mxu0 %v698
      %v834 = vpop.f32.mrf.mxu0
      %v835 = vadd.f32 0.0, %v834
      %v836 = vpop.f32.mrf.mxu0
      %837 = vmatprep.mubr.f32.mxu0 0.0
      %838 = vmatmul.mubr.f32.gmra.mxu0 %v701
      %v839 = vpop.f32.mrf.mxu0
      %v840 = vadd.f32 0.0, %v839
      %v841 = vpop.f32.mrf.mxu0
      %842 = vmatprep.mubr.f32.mxu0 0.0
      %843 = vmatmul.mubr.f32.gmra.mxu0 %v704
      %v844 = vpop.f32.mrf.mxu0
      %v845 = vadd.f32 0.0, %v844
      %v846 = vpop.f32.mrf.mxu0
      %847 = vmatprep.mubr.f32.mxu0 0.0
      %848 = vmatmul.mubr.f32.gmra.mxu0 %v707
      %v849 = vpop.f32.mrf.mxu0
      %v850 = vadd.f32 0.0, %v849
      %v851 = vpop.f32.mrf.mxu0
      %852 = vmatprep.mubr.f32.mxu0 0.0
      %853 = vmatmul.mubr.f32.gmra.mxu0 %v710
      %v854 = vpop.f32.mrf.mxu0
      %v855 = vadd.f32 0.0, %v854
      %v856 = vpop.f32.mrf.mxu0
      %857 = vmatprep.mubr.f32.mxu0 0.0
      %858 = vmatmul.mubr.f32.gmra.mxu0 %v713
      %v859 = vpop.f32.mrf.mxu0
      %v860 = vadd.f32 0.0, %v859
      %v861 = vpop.f32.mrf.mxu0
      %862 = vdwg.mxu0
      %v863 = vadd.f32 %v569, %v785
      %v864 = vadd.f32 %v574, %v790
      %v865 = vadd.f32 %v579, %v795
      %v866 = vadd.f32 %v584, %v800
      %v867 = vadd.f32 %v589, %v805
      %v868 = vadd.f32 %v594, %v810
      %v869 = vadd.f32 %v599, %v815
      %v870 = vadd.f32 %v604, %v820
      %v871 = vadd.f32 %v609, %v825
      %v872 = vadd.f32 %v614, %v830
      %v873 = vadd.f32 %v619, %v835
      %v874 = vadd.f32 %v624, %v840
      %v875 = vadd.f32 %v629, %v845
      %v876 = vadd.f32 %v634, %v850
      %v877 = vadd.f32 %v639, %v855
      %v878 = vadd.f32 %v644, %v860
      %879 = vst [vmem:[%s208] sm:$0xff] %v863
      %880 = vst [vmem:[%s208 + $0x8] sm:$0xff] %v864
      %881 = vst [vmem:[%s208 + $0x10] sm:$0xff] %v865
      %882 = vst [vmem:[%s208 + $0x18] sm:$0xff] %v866
      %883 = vst [vmem:[%s208 + $0x20] sm:$0xff] %v867
      %884 = vst [vmem:[%s208 + $0x28] sm:$0xff] %v868
      %885 = vst [vmem:[%s208 + $0x30] sm:$0xff] %v869
      %886 = vst [vmem:[%s208 + $0x38] sm:$0xff] %v870
      %887 = vst [vmem:[%s208 + $0x40] sm:$0xff] %v871
      %888 = vst [vmem:[%s208 + $0x48] sm:$0xff] %v872
      %889 = vst [vmem:[%s208 + $0x50] sm:$0xff] %v873
      %890 = vst [vmem:[%s208 + $0x58] sm:$0xff] %v874
      %891 = vst [vmem:[%s208 + $0x60] sm:$0xff] %v875
      %892 = vst [vmem:[%s208 + $0x68] sm:$0xff] %v876
      %893 = vst [vmem:[%s208 + $0x70] sm:$0xff] %v877
      %894 = vst [vmem:[%s208 + $0x78] sm:$0xff] %v878
      %v895 = vadd.f32 %v863, %v864
      %v896 = vadd.f32 %v895, %v865
      %v897 = vadd.f32 %v896, %v866
      %v898 = vadd.f32 %v897, %v867
      %v899 = vadd.f32 %v898, %v868
      %v900 = vadd.f32 %v899, %v869
      %v901 = vadd.f32 %v900, %v870
      %v902 = vadd.f32 %v901, %v871
      %v903 = vadd.f32 %v902, %v872
      %v904 = vadd.f32 %v903, %v873
      %v905 = vadd.f32 %v904, %v874
      %v906 = vadd.f32 %v905, %v875
      %v907 = vadd.f32 %v906, %v876
      %v908 = vadd.f32 %v907, %v877
      %v909 = vadd.f32 %v908, %v878
      %v910 = vrot.slane %v909, 4
      %v911 = vadd.f32 %v909, %v910
      %v912 = vrot.slane %v911, 2
      %v913 = vadd.f32 %v911, %v912
      %v914 = vrot.slane %v913, 1
      %v915 = vadd.f32 %v913, %v914
      %916 = vst [vmem:[%s211] sm:$0x1] %v915
      %v917 = vmul.f32 %v863, %v863
      %v918 = vmul.f32 %v864, %v864
      %v919 = vmul.f32 %v865, %v865
      %v920 = vmul.f32 %v866, %v866
      %v921 = vmul.f32 %v867, %v867
      %v922 = vmul.f32 %v868, %v868
      %v923 = vmul.f32 %v869, %v869
      %v924 = vmul.f32 %v870, %v870
      %v925 = vmul.f32 %v871, %v871
      %v926 = vmul.f32 %v872, %v872
      %v927 = vmul.f32 %v873, %v873
      %v928 = vmul.f32 %v874, %v874
      %v929 = vmul.f32 %v875, %v875
      %v930 = vmul.f32 %v876, %v876
      %v931 = vmul.f32 %v877, %v877
      %v932 = vmul.f32 %v878, %v878
      %v933 = vadd.f32 %v917, %v918
      %v934 = vadd.f32 %v933, %v919
      %v935 = vadd.f32 %v934, %v920
      %v936 = vadd.f32 %v935, %v921
      %v937 = vadd.f32 %v936, %v922
      %v938 = vadd.f32 %v937, %v923
      %v939 = vadd.f32 %v938, %v924
      %v940 = vadd.f32 %v939, %v925
      %v941 = vadd.f32 %v940, %v926
      %v942 = vadd.f32 %v941, %v927
      %v943 = vadd.f32 %v942, %v928
      %v944 = vadd.f32 %v943, %v929
      %v945 = vadd.f32 %v944, %v930
      %v946 = vadd.f32 %v945, %v931
      %v947 = vadd.f32 %v946, %v932
      %v948 = vrot.slane %v947, 4
      %v949 = vadd.f32 %v947, %v948
      %v950 = vrot.slane %v949, 2
      %v951 = vadd.f32 %v949, %v950
      %v952 = vrot.slane %v951, 1
      %v953 = vadd.f32 %v951, %v952
      %954 = vst [vmem:[%s214] sm:$0x1] %v953
      %p955 = scmp.lt.s32.totalorder %s16, 3
      %s956 = scalar_select %p955, %s16, 3
      %s957 = smul.addr %s956, 16
      %s958 = smul.addr %s957, 8
      %s959 = scalar_lea.vmem %s2, %s958
      %p960 = scmp.lt.s32.totalorder %s16, 3
      %s961 = scalar_select %p960, %s16, 3
      %s962 = scalar_lea.vmem %s3, %s961
      %p963 = scmp.lt.s32.totalorder %s16, 3
      %s964 = scalar_select %p963, %s16, 3
      %s965 = scalar_lea.vmem %s4, %s964
      // Predicated region
      $region29: #{double_conv.4} parent=27 // pred_check
        %p966 = pneg %p81
      $region30: #{double_conv.4} parent=27 // pred_check_branch
        %968 = sbr.rel (%p966) target = $region32
      $region31: #{double_conv.4} parent=27 // pred_region
        _
      $region32: #{double_conv.4} parent=27 // pred_fallthru
        _
      // Predicated region
      $region33: #{double_conv.4} parent=27 // pred_check
        %p969 = pneg %p107
      $region34: #{double_conv.4} parent=27 // pred_check_branch
        %971 = sbr.rel (%p969) target = $region36
      $region35: #{double_conv.4} parent=27 // pred_region
        _
      $region36: #{double_conv.4} parent=27 // pred_fallthru
        _
      // Predicated region
      $region37: #{double_conv.4} parent=27 // pred_check
        %p972 = pneg %p133
      $region38: #{double_conv.4} parent=27 // pred_check_branch
        %974 = sbr.rel (%p972) target = $region40
      $region39: #{double_conv.4} parent=27 // pred_region
        _
      $region40: #{double_conv.4} parent=27 // pred_fallthru
        _
    $region28: #{double_conv.4} parent=5 // pred_fallthru
      _
    %p975 = scmp.le.s32.totalorder 2, %s11
    // Predicated region
    $region41: #{double_conv.4} parent=5 // pred_check
      %p976 = pneg %p975
    $region42: #{double_conv.4} parent=5 // pred_check_branch
      %978 = sbr.rel (%p976) target = $region44
    $region43: #{double_conv.4} parent=5 // pred_region
      %s979 = ssub.s32 %s11, 2
      // Predicated region
      $region45: #{double_conv.4} parent=43 // pred_check
        %p980 = pneg %p87
      $region46: #{double_conv.4} parent=43 // pred_check_branch
        %982 = sbr.rel (%p980) target = $region48
      $region47: #{double_conv.4} parent=43 // pred_region
        %p983 = scmp.lt.s32.totalorder %s17, 3
        %s984 = scalar_select %p983, %s17, 3
        %s985 = smul.addr %s984, 16
        %s986 = smul.addr %s985, 8
        %s987 = scalar_lea.vmem %s2, %s986
      $region48: #{double_conv.4} parent=43 // pred_fallthru
        _
      // Predicated region
      $region49: #{double_conv.4} parent=43 // pred_check
        %p988 = pneg %p113
      $region50: #{double_conv.4} parent=43 // pred_check_branch
        %990 = sbr.rel (%p988) target = $region52
      $region51: #{double_conv.4} parent=43 // pred_region
        %p991 = scmp.lt.s32.totalorder %s17, 3
        %s992 = scalar_select %p991, %s17, 3
        %s993 = scalar_lea.vmem %s3, %s992
      $region52: #{double_conv.4} parent=43 // pred_fallthru
        _
      // Predicated region
      $region53: #{double_conv.4} parent=43 // pred_check
        %p994 = pneg %p139
      $region54: #{double_conv.4} parent=43 // pred_check_branch
        %996 = sbr.rel (%p994) target = $region56
      $region55: #{double_conv.4} parent=43 // pred_region
        %p997 = scmp.lt.s32.totalorder %s17, 3
        %s998 = scalar_select %p997, %s17, 3
        %s999 = scalar_lea.vmem %s4, %s998
      $region56: #{double_conv.4} parent=43 // pred_fallthru
        _
    $region44: #{double_conv.4} parent=5 // pred_fallthru
      _
  $region6: #{double_conv.4} parent=0 // loop_footer
    %s15 = sadd.s32 1, %s11
  $region7: #{double_conv.4} parent=0 // loop_footer_branch
    %10 = sbr.rel target = $region3
  $region8: #{double_conv.4} parent=0 // loop_exit
    _

// kernel: double_conv.6
$region0: #{double_conv.6}
  #allocation0 [shape = 'u32[]', space=smem, size = 0x4, offset = 0x4, fixed_abs, tag = 'smem constant byte address 0x4 - core index']
  #allocation1 [shape = 'u32[144,128]{1,0:T(1,128)}', space=vmem, size = 0x12000, scoped, tag = 'internal scratch']
  %s0 = inlined_call_operand.vmem [shape: f32[4,10,16,24], index: 0, kind: input, shape index: {}]
  %s1 = inlined_call_operand.vmem [shape: f32[3,24,128], index: 1, kind: input, shape index: {}]
  %s2 = inlined_call_operand.vmem [shape: f32[4,128,128], index: 2, kind: output, shape index: {0}]
  %s3 = inlined_call_operand.vmem [shape: f32[4,1,128], index: 3, kind: output, shape index: {1}]
  %s4 = inlined_call_operand.vmem [shape: f32[4,1,128], index: 4, kind: output, shape index: {2}]
  %5 = xla_tuple %s2, %s3, %s4
  %s6 = sld [smem:[#allocation0]]
  $region57: #{double_conv.6} parent=0
    _
  %s8 = ssub.s32 1, %s6
  %s9 = scalar_select 0, %s8, %s6
  loop: start=0, step=1, limit=6
  $region2: #{double_conv.6} parent=0 // loop_pre_header
    _
  $region3: #{double_conv.6} parent=0 // loop_header
    %s11 = sphi 0, %s15
    %p12 = scmp.ge.s32.totalorder %s11, 6
    %s21 = sphi 0, %s23
    %s24 = sphi 0, %s21
    %s25 = sphi 0, %s24
    %s41 = sphi 0, %s25
    %s45 = sphi 0, %s45
    %s47 = sphi 0, %s45
    %s48 = sphi 0, %s47
    %s62 = sphi 0, %s48
    %s68 = sphi 0, %s70
    %s71 = sphi 0, %s68
    %s72 = sphi 0, %s71
    %s88 = sphi 0, %s72
    %s94 = sphi 0, %s96
    %s97 = sphi 0, %s94
    %s98 = sphi 0, %s97
    %s114 = sphi 0, %s98
    %s120 = sphi 0, %s122
    %s123 = sphi 0, %s120
    %s124 = sphi 0, %s123
    %s140 = sphi 0, %s124
  $region4: #{double_conv.6} parent=0 // loop_header_branch
    %14 = sbr.rel (%p12) target = $region8
  $region5: #{double_conv.6} parent=0 // loop_body
    %s16 = ssub.s32 %s11, 1
    %s17 = ssub.s32 %s11, 2
    %s18 = sadd.s32 %s11, 1
    %s19 = ssub.s32 %s11, %s18
    %p20 = scmp.eq.s32.totalorder %s19, 0
    %s22 = sadd.s32 %s21, 1
    %s23 = scalar_select %p20, %s21, %s22
    %p26 = pneg %p20
    %p27 = scmp.eq.s32.totalorder %s11, 3
    %p28 = por %p26, %p27
    %p29 = scmp.ne.s32.totalorder %s21, %s24
    %p30 = scmp.eq.s32.totalorder %s11, 0
    %p31 = por %p29, %p30
    %p32 = scmp.ne.s32.totalorder %s21, %s24
    %p33 = scmp.eq.s32.totalorder %s16, 3
    %p34 = por %p32, %p33
    %p35 = scmp.ne.s32.totalorder %s24, %s25
    %p36 = scmp.eq.s32.totalorder %s16, 0
    %p37 = por %p35, %p36
    %p38 = scmp.ne.s32.totalorder %s24, %s25
    %p39 = scmp.eq.s32.totalorder %s17, 3
    %p40 = por %p38, %p39
    %p42 = scmp.ne.s32.totalorder %s25, %s41
    %p43 = scmp.eq.s32.totalorder %s17, 0
    %p44 = por %p42, %p43
    %s46 = sadd.s32 %s45, 1
    %p49 = scmp.eq.s32.totalorder %s11, 3
    %p50 = scmp.ne.s32.totalorder %s45, %s47
    %p51 = scmp.eq.s32.totalorder %s11, 0
    %p52 = por %p50, %p51
    %p53 = scmp.ne.s32.totalorder %s45, %s47
    %p54 = scmp.eq.s32.totalorder %s16, 3
    %p55 = por %p53, %p54
    %p56 = scmp.ne.s32.totalorder %s47, %s48
    %p57 = scmp.eq.s32.totalorder %s16, 0
    %p58 = por %p56, %p57
    %p59 = scmp.ne.s32.totalorder %s47, %s48
    %p60 = scmp.eq.s32.totalorder %s17, 3
    %p61 = por %p59, %p60
    %p63 = scmp.ne.s32.totalorder %s48, %s62
    %p64 = scmp.eq.s32.totalorder %s17, 0
    %p65 = por %p63, %p64
    %s66 = ssub.s32 %s11, %s18
    %p67 = scmp.eq.s32.totalorder %s66, 0
    %s69 = sadd.s32 %s68, 1
    %s70 = scalar_select %p67, %s68, %s69
    %p73 = pneg %p67
    %p74 = scmp.eq.s32.totalorder %s11, 3
    %p75 = por %p73, %p74
    %p76 = scmp.ne.s32.totalorder %s68, %s71
    %p77 = scmp.eq.s32.totalorder %s11, 0
    %p78 = por %p76, %p77
    %p79 = scmp.ne.s32.totalorder %s68, %s71
    %p80 = scmp.eq.s32.totalorder %s16, 3
    %p81 = por %p79, %p80
    %p82 = scmp.ne.s32.totalorder %s71, %s72
    %p83 = scmp.eq.s32.totalorder %s16, 0
    %p84 = por %p82, %p83
    %p85 = scmp.ne.s32.totalorder %s71, %s72
    %p86 = scmp.eq.s32.totalorder %s17, 3
    %p87 = por %p85, %p86
    %p89 = scmp.ne.s32.totalorder %s72, %s88
    %p90 = scmp.eq.s32.totalorder %s17, 0
    %p91 = por %p89, %p90
    %s92 = ssub.s32 %s11, %s18
    %p93 = scmp.eq.s32.totalorder %s92, 0
    %s95 = sadd.s32 %s94, 1
    %s96 = scalar_select %p93, %s94, %s95
    %p99 = pneg %p93
    %p100 = scmp.eq.s32.totalorder %s11, 3
    %p101 = por %p99, %p100
    %p102 = scmp.ne.s32.totalorder %s94, %s97
    %p103 = scmp.eq.s32.totalorder %s11, 0
    %p104 = por %p102, %p103
    %p105 = scmp.ne.s32.totalorder %s94, %s97
    %p106 = scmp.eq.s32.totalorder %s16, 3
    %p107 = por %p105, %p106
    %p108 = scmp.ne.s32.totalorder %s97, %s98
    %p109 = scmp.eq.s32.totalorder %s16, 0
    %p110 = por %p108, %p109
    %p111 = scmp.ne.s32.totalorder %s97, %s98
    %p112 = scmp.eq.s32.totalorder %s17, 3
    %p113 = por %p111, %p112
    %p115 = scmp.ne.s32.totalorder %s98, %s114
    %p116 = scmp.eq.s32.totalorder %s17, 0
    %p117 = por %p115, %p116
    %s118 = ssub.s32 %s11, %s18
    %p119 = scmp.eq.s32.totalorder %s118, 0
    %s121 = sadd.s32 %s120, 1
    %s122 = scalar_select %p119, %s120, %s121
    %p125 = pneg %p119
    %p126 = scmp.eq.s32.totalorder %s11, 3
    %p127 = por %p125, %p126
    %p128 = scmp.ne.s32.totalorder %s120, %s123
    %p129 = scmp.eq.s32.totalorder %s11, 0
    %p130 = por %p128, %p129
    %p131 = scmp.ne.s32.totalorder %s120, %s123
    %p132 = scmp.eq.s32.totalorder %s16, 3
    %p133 = por %p131, %p132
    %p134 = scmp.ne.s32.totalorder %s123, %s124
    %p135 = scmp.eq.s32.totalorder %s16, 0
    %p136 = por %p134, %p135
    %p137 = scmp.ne.s32.totalorder %s123, %s124
    %p138 = scmp.eq.s32.totalorder %s17, 3
    %p139 = por %p137, %p138
    %p141 = scmp.ne.s32.totalorder %s124, %s140
    %p142 = scmp.eq.s32.totalorder %s17, 0
    %p143 = por %p141, %p142
    %p144 = scmp.le.s32.totalorder 1, %s11
    %p145 = scmp.lt.s32.totalorder %s11, 5
    %p146 = pnand %p144, %p145
    %p147 = pneg %p146
    // Predicated region
    $region9: #{double_conv.6} parent=5 // pred_check
      _
    $region10: #{double_conv.6} parent=5 // pred_check_branch
      %149 = sbr.rel (%p146) target = $region12
    $region11: #{double_conv.6} parent=5 // pred_region
      %s150 = ssub.s32 %s11, 1
      // Predicated region
      $region13: #{double_conv.6} parent=11 // pred_check
        %p151 = pneg %p58
      $region14: #{double_conv.6} parent=11 // pred_check_branch
        %153 = sbr.rel (%p151) target = $region16
      $region15: #{double_conv.6} parent=11 // pred_region
        _
      $region16: #{double_conv.6} parent=11 // pred_fallthru
        _
    $region12: #{double_conv.6} parent=5 // pred_fallthru
      _
    %p154 = scmp.lt.s32.totalorder %s11, 4
    // Predicated region
    $region17: #{double_conv.6} parent=5 // pred_check
      %p155 = pneg %p154
    $region18: #{double_conv.6} parent=5 // pred_check_branch
      %157 = sbr.rel (%p155) target = $region20
    $region19: #{double_conv.6} parent=5 // pred_region
      // Predicated region
      $region21: #{double_conv.6} parent=19 // pred_check
        %p158 = pneg %p31
      $region22: #{double_conv.6} parent=19 // pred_check_branch
        %160 = sbr.rel (%p158) target = $region24
      $region23: #{double_conv.6} parent=19 // pred_region
        %p161 = scmp.lt.s32.totalorder %s11, 3
        %s162 = scalar_select %p161, %s11, 3
        %s163 = smul.addr %s162, 20
        %s164 = smul.addr %s163, 8
        %s165 = scalar_lea.vmem %s0, %s164
      $region24: #{double_conv.6} parent=19 // pred_fallthru
        _
    $region20: #{double_conv.6} parent=5 // pred_fallthru
      _
    %p166 = scmp.le.s32.totalorder 1, %s11
    %p167 = scmp.lt.s32.totalorder %s11, 5
    %p168 = pnand %p166, %p167
    %p169 = pneg %p168
    // Predicated region
    $region25: #{double_conv.6} parent=5 // pred_check
      _
    $region26: #{double_conv.6} parent=5 // pred_check_branch
      %171 = sbr.rel (%p168) target = $region28
    $region27: #{double_conv.6} parent=5 // pred_region
      %s172 = ssub.s32 %s11, 1
      %p173 = scmp.lt.s32.totalorder %s16, 3
      %s174 = scalar_select %p173, %s16, 3
      %s175 = smul.addr %s174, 20
      %s176 = smul.addr %s175, 8
      %s177 = scalar_lea.vmem %s0, %s176
      %p178 = pneg %p37
      %p179 = pneg %p34
      %p180 = pneg %p58
      %p181 = pneg %p55
      %p182 = pneg %p84
      %p183 = pneg %p81
      %p184 = scmp.lt.s32.totalorder %s16, 3
      %s185 = scalar_select %p184, %s16, 3
      %s186 = smul.addr %s185, 16
      %s187 = smul.addr %s186, 8
      %s188 = scalar_lea.vmem %s2, %s187
      %p189 = pneg %p110
      %p190 = pneg %p107
      %p191 = scmp.lt.s32.totalorder %s16, 3
      %s192 = scalar_select %p191, %s16, 3
      %s193 = scalar_lea.vmem %s3, %s192
      %p194 = pneg %p136
      %p195 = pneg %p133
      %p196 = scmp.lt.s32.totalorder %s16, 3
      %s197 = scalar_select %p196, %s16, 3
      %s198 = scalar_lea.vmem %s4, %s197
      %p199 = scmp.lt.s32.totalorder %s16, 3
      %s200 = scalar_select %p199, %s16, 3
      %s201 = smul.addr %s200, 20
      %s202 = smul.addr %s201, 8
      %s203 = scalar_lea.vmem %s0, %s202
      %p204 = scmp.lt.s32.totalorder %s16, 3
      %s205 = scalar_select %p204, %s16, 3
      %s206 = smul.addr %s205, 16
      %s207 = smul.addr %s206, 8
      %s208 = scalar_lea.vmem %s2, %s207
      %p209 = scmp.lt.s32.totalorder %s16, 3
      %s210 = scalar_select %p209, %s16, 3
      %s211 = scalar_lea.vmem %s3, %s210
      %p212 = scmp.lt.s32.totalorder %s16, 3
      %s213 = scalar_select %p212, %s16, 3
      %s214 = scalar_lea.vmem %s4, %s213
      %v215 = vld [vmem:[%s203] sm:$0xff]
      %v216 = vld [vmem:[%s203 + $0x8] sm:$0xff]
      %v217 = vld [vmem:[%s203 + $0x10] sm:$0xff]
      %v218 = vld [vmem:[%s203 + $0x18] sm:$0xff]
      %v219 = vld [vmem:[%s203 + $0x20] sm:$0xff]
      %v220 = vld [vmem:[%s203 + $0x28] sm:$0xff]
      %v221 = vld [vmem:[%s203 + $0x30] sm:$0xff]
      %v222 = vld [vmem:[%s203 + $0x38] sm:$0xff]
      %v223 = vld [vmem:[%s203 + $0x40] sm:$0xff]
      %v224 = vld [vmem:[%s203 + $0x48] sm:$0xff]
      %v225 = vld [vmem:[%s203 + $0x50] sm:$0xff]
      %v226 = vld [vmem:[%s203 + $0x58] sm:$0xff]
      %v227 = vld [vmem:[%s203 + $0x60] sm:$0xff]
      %v228 = vld [vmem:[%s203 + $0x68] sm:$0xff]
      %v229 = vld [vmem:[%s203 + $0x70] sm:$0xff]
      %v230 = vld [vmem:[%s203 + $0x78] sm:$0xff]
      %v231 = vld [vmem:[%s1] sm:$0xff]
      %v232 = vld [vmem:[%s1 + $0x8] sm:$0xff]
      %v233 = vld [vmem:[%s1 + $0x10] sm:$0xff]
      %s234 = scalar_lea.vmem %s203, 16
      %v235 = vld [vmem:[%s234] sm:$0xff]
      %v236 = vld [vmem:[%s234 + $0x8] sm:$0xff]
      %v237 = vld [vmem:[%s234 + $0x10] sm:$0xff]
      %v238 = vld [vmem:[%s234 + $0x18] sm:$0xff]
      %v239 = vld [vmem:[%s234 + $0x20] sm:$0xff]
      %v240 = vld [vmem:[%s234 + $0x28] sm:$0xff]
      %v241 = vld [vmem:[%s234 + $0x30] sm:$0xff]
      %v242 = vld [vmem:[%s234 + $0x38] sm:$0xff]
      %v243 = vld [vmem:[%s234 + $0x40] sm:$0xff]
      %v244 = vld [vmem:[%s234 + $0x48] sm:$0xff]
      %v245 = vld [vmem:[%s234 + $0x50] sm:$0xff]
      %v246 = vld [vmem:[%s234 + $0x58] sm:$0xff]
      %v247 = vld [vmem:[%s234 + $0x60] sm:$0xff]
      %v248 = vld [vmem:[%s234 + $0x68] sm:$0xff]
      %v249 = vld [vmem:[%s234 + $0x70] sm:$0xff]
      %v250 = vld [vmem:[%s234 + $0x78] sm:$0xff]
      %s251 = scalar_lea.vmem %s1, 24
      %v252 = vld [vmem:[%s251] sm:$0xff]
      %v253 = vld [vmem:[%s251 + $0x8] sm:$0xff]
      %v254 = vld [vmem:[%s251 + $0x10] sm:$0xff]
      %vm255 = vcmask 195584
      %v257 = vsel %vm255, %v235, 0
      %v260 = vsel %vm255, %v236, 0
      %v263 = vsel %vm255, %v237, 0
      %v266 = vsel %vm255, %v238, 0
      %v269 = vsel %vm255, %v239, 0
      %v272 = vsel %vm255, %v240, 0
      %v275 = vsel %vm255, %v241, 0
      %v278 = vsel %vm255, %v242, 0
      %v281 = vsel %vm255, %v243, 0
      %v284 = vsel %vm255, %v244, 0
      %v287 = vsel %vm255, %v245, 0
      %v290 = vsel %vm255, %v246, 0
      %v293 = vsel %vm255, %v247, 0
      %v296 = vsel %vm255, %v248, 0
      %v299 = vsel %vm255, %v249, 0
      %v302 = vsel %vm255, %v250, 0
      %304 = vmatprep.subr.mxu0 0.0
      %305 = vmatpush1.msra.mxu0 0.0
      %306 = vmatprep.subr.mxu0 0.0
      %307 = vmatpush1.msra.mxu0 0.0
      %308 = vmatprep.subr.mxu0 0.0
      %309 = vmatpush1.msra.mxu0 0.0
      %310 = vmatprep.subr.mxu0 0.0
      %311 = vmatpush1.msra.mxu0 0.0
      %312 = vmatprep.subr.mxu0 0.0
      %313 = vmatpush1.msra.mxu0 0.0
      %314 = vmatprep.subr.mxu0 0.0
      %315 = vmatpush1.msra.mxu0 0.0
      %316 = vmatprep.subr.mxu0 0.0
      %317 = vmatpush1.msra.mxu0 0.0
      %318 = vmatprep.subr.mxu0 0.0
      %319 = vmatpush1.msra.mxu0 0.0
      %320 = vmatprep.subr.mxu0 0.0
      %321 = vmatpush1.msra.mxu0 0.0
      %322 = vmatprep.subr.mxu0 0.0
      %323 = vmatpush1.msra.mxu0 0.0
      %324 = vmatprep.subr.mxu0 0.0
      %325 = vmatpush1.msra.mxu0 0.0
      %326 = vmatprep.subr.mxu0 0.0
      %327 = vmatpush1.msra.mxu0 0.0
      %328 = vmatprep.subr.mxu0 0.0
      %329 = vmatpush1.msra.mxu0 0.0
      %330 = vmatprep.subr.mxu0 0.0
      %331 = vmatpush1.msra.mxu0 %v254
      %332 = vmatprep.subr.mxu0 0.0
      %333 = vmatpush1.msra.mxu0 %v253
      %334 = vmatprep.subr.mxu0 0.0
      %335 = vmatpush1.msra.mxu0 %v252
      %336 = vmatprep.subr.mxu0 0.0
      %337 = vmatpush2.msra.mxu0 0.0
      %338 = vmatprep.subr.mxu0 0.0
      %339 = vmatpush2.msra.mxu0 0.0
      %340 = vmatprep.subr.mxu0 0.0
      %341 = vmatpush2.msra.mxu0 0.0
      %342 = vmatprep.subr.mxu0 0.0
      %343 = vmatpush2.msra.mxu0 0.0
      %344 = vmatprep.subr.mxu0 0.0
      %345 = vmatpush2.msra.mxu0 0.0
      %346 = vmatprep.subr.mxu0 0.0
      %347 = vmatpush2.msra.mxu0 0.0
      %348 = vmatprep.subr.mxu0 0.0
      %349 = vmatpush2.msra.mxu0 0.0
      %350 = vmatprep.subr.mxu0 0.0
      %351 = vmatpush2.msra.mxu0 0.0
      %352 = vmatprep.subr.mxu0 0.0
      %353 = vmatpush2.msra.mxu0 0.0
      %354 = vmatprep.subr.mxu0 0.0
      %355 = vmatpush2.msra.mxu0 0.0
      %356 = vmatprep.subr.mxu0 0.0
      %357 = vmatpush2.msra.mxu0 0.0
      %358 = vmatprep.subr.mxu0 0.0
      %359 = vmatpush2.msra.mxu0 0.0
      %360 = vmatprep.subr.mxu0 0.0
      %361 = vmatpush2.msra.mxu0 0.0
      %362 = vmatprep.subr.mxu0 0.0
      %363 = vmatpush2.msra.mxu0 0.0
      %364 = vmatprep.subr.mxu0 0.0
      %365 = vmatpush2.msra.mxu0 0.0
      %366 = vmatprep.subr.mxu0 0.0
      %367 = vmatpush2.msra.mxu0 0.0
      %368 = vmatprep.mubr.f32.mxu0 0.0
      %369 = vmatmul.mubr.f32.gmra.mxu0 %v257
      %v370 = vpop.f32.mrf.mxu0
      %v371 = vadd.f32 0.0, %v370
      %v372 = vpop.f32.mrf.mxu0
      %373 = vmatprep.mubr.f32.mxu0 0.0
      %374 = vmatmul.mubr.f32.gmra.mxu0 %v260
      %v375 = vpop.f32.mrf.mxu0
      %v376 = vadd.f32 0.0, %v375
      %v377 = vpop.f32.mrf.mxu0
      %378 = vmatprep.mubr.f32.mxu0 0.0
      %379 = vmatmul.mubr.f32.gmra.mxu0 %v263
      %v380 = vpop.f32.mrf.mxu0
      %v381 = vadd.f32 0.0, %v380
      %v382 = vpop.f32.mrf.mxu0
      %383 = vmatprep.mubr.f32.mxu0 0.0
      %384 = vmatmul.mubr.f32.gmra.mxu0 %v266
      %v385 = vpop.f32.mrf.mxu0
      %v386 = vadd.f32 0.0, %v385
      %v387 = vpop.f32.mrf.mxu0
      %388 = vmatprep.mubr.f32.mxu0 0.0
      %389 = vmatmul.mubr.f32.gmra.mxu0 %v269
      %v390 = vpop.f32.mrf.mxu0
      %v391 = vadd.f32 0.0, %v390
      %v392 = vpop.f32.mrf.mxu0
      %393 = vmatprep.mubr.f32.mxu0 0.0
      %394 = vmatmul.mubr.f32.gmra.mxu0 %v272
      %v395 = vpop.f32.mrf.mxu0
      %v396 = vadd.f32 0.0, %v395
      %v397 = vpop.f32.mrf.mxu0
      %398 = vmatprep.mubr.f32.mxu0 0.0
      %399 = vmatmul.mubr.f32.gmra.mxu0 %v275
      %v400 = vpop.f32.mrf.mxu0
      %v401 = vadd.f32 0.0, %v400
      %v402 = vpop.f32.mrf.mxu0
      %403 = vmatprep.mubr.f32.mxu0 0.0
      %404 = vmatmul.mubr.f32.gmra.mxu0 %v278
      %v405 = vpop.f32.mrf.mxu0
      %v406 = vadd.f32 0.0, %v405
      %v407 = vpop.f32.mrf.mxu0
      %408 = vmatprep.mubr.f32.mxu0 0.0
      %409 = vmatmul.mubr.f32.gmra.mxu0 %v281
      %v410 = vpop.f32.mrf.mxu0
      %v411 = vadd.f32 0.0, %v410
      %v412 = vpop.f32.mrf.mxu0
      %413 = vmatprep.mubr.f32.mxu0 0.0
      %414 = vmatmul.mubr.f32.gmra.mxu0 %v284
      %v415 = vpop.f32.mrf.mxu0
      %v416 = vadd.f32 0.0, %v415
      %v417 = vpop.f32.mrf.mxu0
      %418 = vmatprep.mubr.f32.mxu0 0.0
      %419 = vmatmul.mubr.f32.gmra.mxu0 %v287
      %v420 = vpop.f32.mrf.mxu0
      %v421 = vadd.f32 0.0, %v420
      %v422 = vpop.f32.mrf.mxu0
      %423 = vmatprep.mubr.f32.mxu0 0.0
      %424 = vmatmul.mubr.f32.gmra.mxu0 %v290
      %v425 = vpop.f32.mrf.mxu0
      %v426 = vadd.f32 0.0, %v425
      %v427 = vpop.f32.mrf.mxu0
      %428 = vmatprep.mubr.f32.mxu0 0.0
      %429 = vmatmul.mubr.f32.gmra.mxu0 %v293
      %v430 = vpop.f32.mrf.mxu0
      %v431 = vadd.f32 0.0, %v430
      %v432 = vpop.f32.mrf.mxu0
      %433 = vmatprep.mubr.f32.mxu0 0.0
      %434 = vmatmul.mubr.f32.gmra.mxu0 %v296
      %v435 = vpop.f32.mrf.mxu0
      %v436 = vadd.f32 0.0, %v435
      %v437 = vpop.f32.mrf.mxu0
      %438 = vmatprep.mubr.f32.mxu0 0.0
      %439 = vmatmul.mubr.f32.gmra.mxu0 %v299
      %v440 = vpop.f32.mrf.mxu0
      %v441 = vadd.f32 0.0, %v440
      %v442 = vpop.f32.mrf.mxu0
      %443 = vmatprep.mubr.f32.mxu0 0.0
      %444 = vmatmul.mubr.f32.gmra.mxu0 %v302
      %v445 = vpop.f32.mrf.mxu0
      %v446 = vadd.f32 0.0, %v445
      %v447 = vpop.f32.mrf.mxu0
      %448 = vdwg.mxu0
      %v450 = vsel %vm255, %v215, 0
      %v453 = vsel %vm255, %v216, 0
      %v456 = vsel %vm255, %v217, 0
      %v459 = vsel %vm255, %v218, 0
      %v462 = vsel %vm255, %v219, 0
      %v465 = vsel %vm255, %v220, 0
      %v468 = vsel %vm255, %v221, 0
      %v471 = vsel %vm255, %v222, 0
      %v474 = vsel %vm255, %v223, 0
      %v477 = vsel %vm255, %v224, 0
      %v480 = vsel %vm255, %v225, 0
      %v483 = vsel %vm255, %v226, 0
      %v486 = vsel %vm255, %v227, 0
      %v489 = vsel %vm255, %v228, 0
      %v492 = vsel %vm255, %v229, 0
      %v495 = vsel %vm255, %v230, 0
      %497 = vmatprep.subr.mxu0 0.0
      %498 = vmatpush1.msra.mxu0 0.0
      %499 = vmatprep.subr.mxu0 0.0
      %500 = vmatpush1.msra.mxu0 0.0
      %501 = vmatprep.subr.mxu0 0.0
      %502 = vmatpush1.msra.mxu0 0.0
      %503 = vmatprep.subr.mxu0 0.0
      %504 = vmatpush1.msra.mxu0 0.0
      %505 = vmatprep.subr.mxu0 0.0
      %506 = vmatpush1.msra.mxu0 0.0
      %507 = vmatprep.subr.mxu0 0.0
      %508 = vmatpush1.msra.mxu0 0.0
      %509 = vmatprep.subr.mxu0 0.0
      %510 = vmatpush1.msra.mxu0 0.0
      %511 = vmatprep.subr.mxu0 0.0
      %512 = vmatpush1.msra.mxu0 0.0
      %513 = vmatprep.subr.mxu0 0.0
      %514 = vmatpush1.msra.mxu0 0.0
      %515 = vmatprep.subr.mxu0 0.0
      %516 = vmatpush1.msra.mxu0 0.0
      %517 = vmatprep.subr.mxu0 0.0
      %518 = vmatpush1.msra.mxu0 0.0
      %519 = vmatprep.subr.mxu0 0.0
      %520 = vmatpush1.msra.mxu0 0.0
      %521 = vmatprep.subr.mxu0 0.0
      %522 = vmatpush1.msra.mxu0 0.0
      %523 = vmatprep.subr.mxu0 0.0
      %524 = vmatpush1.msra.mxu0 %v233
      %525 = vmatprep.subr.mxu0 0.0
      %526 = vmatpush1.msra.mxu0 %v232
      %527 = vmatprep.subr.mxu0 0.0
      %528 = vmatpush1.msra.mxu0 %v231
      %529 = vmatprep.subr.mxu0 0.0
      %530 = vmatpush2.msra.mxu0 0.0
      %531 = vmatprep.subr.mxu0 0.0
      %532 = vmatpush2.msra.mxu0 0.0
      %533 = vmatprep.subr.mxu0 0.0
      %534 = vmatpush2.msra.mxu0 0.0
      %535 = vmatprep.subr.mxu0 0.0
      %536 = vmatpush2.msra.mxu0 0.0
      %537 = vmatprep.subr.mxu0 0.0
      %538 = vmatpush2.msra.mxu0 0.0
      %539 = vmatprep.subr.mxu0 0.0
      %540 = vmatpush2.msra.mxu0 0.0
      %541 = vmatprep.subr.mxu0 0.0
      %542 = vmatpush2.msra.mxu0 0.0
      %543 = vmatprep.subr.mxu0 0.0
      %544 = vmatpush2.msra.mxu0 0.0
      %545 = vmatprep.subr.mxu0 0.0
      %546 = vmatpush2.msra.mxu0 0.0
      %547 = vmatprep.subr.mxu0 0.0
      %548 = vmatpush2.msra.mxu0 0.0
      %549 = vmatprep.subr.mxu0 0.0
      %550 = vmatpush2.msra.mxu0 0.0
      %551 = vmatprep.subr.mxu0 0.0
      %552 = vmatpush2.msra.mxu0 0.0
      %553 = vmatprep.subr.mxu0 0.0
      %554 = vmatpush2.msra.mxu0 0.0
      %555 = vmatprep.subr.mxu0 0.0
      %556 = vmatpush2.msra.mxu0 0.0
      %557 = vmatprep.subr.mxu0 0.0
      %558 = vmatpush2.msra.mxu0 0.0
      %559 = vmatprep.subr.mxu0 0.0
      %560 = vmatpush2.msra.mxu0 0.0
      %561 = vmatprep.mubr.f32.mxu0 0.0
      %562 = vmatmul.mubr.f32.gmra.mxu0 %v450
      %v563 = vpop.f32.mrf.mxu0
      %v564 = vadd.f32 %v371, %v563
      %v565 = vpop.f32.mrf.mxu0
      %566 = vmatprep.mubr.f32.mxu0 0.0
      %567 = vmatmul.mubr.f32.gmra.mxu0 %v453
      %v568 = vpop.f32.mrf.mxu0
      %v569 = vadd.f32 %v376, %v568
      %v570 = vpop.f32.mrf.mxu0
      %571 = vmatprep.mubr.f32.mxu0 0.0
      %572 = vmatmul.mubr.f32.gmra.mxu0 %v456
      %v573 = vpop.f32.mrf.mxu0
      %v574 = vadd.f32 %v381, %v573
      %v575 = vpop.f32.mrf.mxu0
      %576 = vmatprep.mubr.f32.mxu0 0.0
      %577 = vmatmul.mubr.f32.gmra.mxu0 %v459
      %v578 = vpop.f32.mrf.mxu0
      %v579 = vadd.f32 %v386, %v578
      %v580 = vpop.f32.mrf.mxu0
      %581 = vmatprep.mubr.f32.mxu0 0.0
      %582 = vmatmul.mubr.f32.gmra.mxu0 %v462
      %v583 = vpop.f32.mrf.mxu0
      %v584 = vadd.f32 %v391, %v583
      %v585 = vpop.f32.mrf.mxu0
      %586 = vmatprep.mubr.f32.mxu0 0.0
      %587 = vmatmul.mubr.f32.gmra.mxu0 %v465
      %v588 = vpop.f32.mrf.mxu0
      %v589 = vadd.f32 %v396, %v588
      %v590 = vpop.f32.mrf.mxu0
      %591 = vmatprep.mubr.f32.mxu0 0.0
      %592 = vmatmul.mubr.f32.gmra.mxu0 %v468
      %v593 = vpop.f32.mrf.mxu0
      %v594 = vadd.f32 %v401, %v593
      %v595 = vpop.f32.mrf.mxu0
      %596 = vmatprep.mubr.f32.mxu0 0.0
      %597 = vmatmul.mubr.f32.gmra.mxu0 %v471
      %v598 = vpop.f32.mrf.mxu0
      %v599 = vadd.f32 %v406, %v598
      %v600 = vpop.f32.mrf.mxu0
      %601 = vmatprep.mubr.f32.mxu0 0.0
      %602 = vmatmul.mubr.f32.gmra.mxu0 %v474
      %v603 = vpop.f32.mrf.mxu0
      %v604 = vadd.f32 %v411, %v603
      %v605 = vpop.f32.mrf.mxu0
      %606 = vmatprep.mubr.f32.mxu0 0.0
      %607 = vmatmul.mubr.f32.gmra.mxu0 %v477
      %v608 = vpop.f32.mrf.mxu0
      %v609 = vadd.f32 %v416, %v608
      %v610 = vpop.f32.mrf.mxu0
      %611 = vmatprep.mubr.f32.mxu0 0.0
      %612 = vmatmul.mubr.f32.gmra.mxu0 %v480
      %v613 = vpop.f32.mrf.mxu0
      %v614 = vadd.f32 %v421, %v613
      %v615 = vpop.f32.mrf.mxu0
      %616 = vmatprep.mubr.f32.mxu0 0.0
      %617 = vmatmul.mubr.f32.gmra.mxu0 %v483
      %v618 = vpop.f32.mrf.mxu0
      %v619 = vadd.f32 %v426, %v618
      %v620 = vpop.f32.mrf.mxu0
      %621 = vmatprep.mubr.f32.mxu0 0.0
      %622 = vmatmul.mubr.f32.gmra.mxu0 %v486
      %v623 = vpop.f32.mrf.mxu0
      %v624 = vadd.f32 %v431, %v623
      %v625 = vpop.f32.mrf.mxu0
      %626 = vmatprep.mubr.f32.mxu0 0.0
      %627 = vmatmul.mubr.f32.gmra.mxu0 %v489
      %v628 = vpop.f32.mrf.mxu0
      %v629 = vadd.f32 %v436, %v628
      %v630 = vpop.f32.mrf.mxu0
      %631 = vmatprep.mubr.f32.mxu0 0.0
      %632 = vmatmul.mubr.f32.gmra.mxu0 %v492
      %v633 = vpop.f32.mrf.mxu0
      %v634 = vadd.f32 %v441, %v633
      %v635 = vpop.f32.mrf.mxu0
      %636 = vmatprep.mubr.f32.mxu0 0.0
      %637 = vmatmul.mubr.f32.gmra.mxu0 %v495
      %v638 = vpop.f32.mrf.mxu0
      %v639 = vadd.f32 %v446, %v638
      %v640 = vpop.f32.mrf.mxu0
      %641 = vdwg.mxu0
      %s642 = scalar_lea.vmem %s203, 32
      %v643 = vld [vmem:[%s642] sm:$0xff]
      %v644 = vld [vmem:[%s642 + $0x8] sm:$0xff]
      %v645 = vld [vmem:[%s642 + $0x10] sm:$0xff]
      %v646 = vld [vmem:[%s642 + $0x18] sm:$0xff]
      %v647 = vld [vmem:[%s642 + $0x20] sm:$0xff]
      %v648 = vld [vmem:[%s642 + $0x28] sm:$0xff]
      %v649 = vld [vmem:[%s642 + $0x30] sm:$0xff]
      %v650 = vld [vmem:[%s642 + $0x38] sm:$0xff]
      %v651 = vld [vmem:[%s642 + $0x40] sm:$0xff]
      %v652 = vld [vmem:[%s642 + $0x48] sm:$0xff]
      %v653 = vld [vmem:[%s642 + $0x50] sm:$0xff]
      %v654 = vld [vmem:[%s642 + $0x58] sm:$0xff]
      %v655 = vld [vmem:[%s642 + $0x60] sm:$0xff]
      %v656 = vld [vmem:[%s642 + $0x68] sm:$0xff]
      %v657 = vld [vmem:[%s642 + $0x70] sm:$0xff]
      %v658 = vld [vmem:[%s642 + $0x78] sm:$0xff]
      %s659 = scalar_lea.vmem %s1, 48
      %v660 = vld [vmem:[%s659] sm:$0xff]
      %v661 = vld [vmem:[%s659 + $0x8] sm:$0xff]
      %v662 = vld [vmem:[%s659 + $0x10] sm:$0xff]
      %v664 = vsel %vm255, %v643, 0
      %v667 = vsel %vm255, %v644, 0
      %v670 = vsel %vm255, %v645, 0
      %v673 = vsel %vm255, %v646, 0
      %v676 = vsel %vm255, %v647, 0
      %v679 = vsel %vm255, %v648, 0
      %v682 = vsel %vm255, %v649, 0
      %v685 = vsel %vm255, %v650, 0
      %v688 = vsel %vm255, %v651, 0
      %v691 = vsel %vm255, %v652, 0
      %v694 = vsel %vm255, %v653, 0
      %v697 = vsel %vm255, %v654, 0
      %v700 = vsel %vm255, %v655, 0
      %v703 = vsel %vm255, %v656, 0
      %v706 = vsel %vm255, %v657, 0
      %v709 = vsel %vm255, %v658, 0
      %711 = vmatprep.subr.mxu0 0.0
      %712 = vmatpush1.msra.mxu0 0.0
      %713 = vmatprep.subr.mxu0 0.0
      %714 = vmatpush1.msra.mxu0 0.0
      %715 = vmatprep.subr.mxu0 0.0
      %716 = vmatpush1.msra.mxu0 0.0
      %717 = vmatprep.subr.mxu0 0.0
      %718 = vmatpush1.msra.mxu0 0.0
      %719 = vmatprep.subr.mxu0 0.0
      %720 = vmatpush1.msra.mxu0 0.0
      %721 = vmatprep.subr.mxu0 0.0
      %722 = vmatpush1.msra.mxu0 0.0
      %723 = vmatprep.subr.mxu0 0.0
      %724 = vmatpush1.msra.mxu0 0.0
      %725 = vmatprep.subr.mxu0 0.0
      %726 = vmatpush1.msra.mxu0 0.0
      %727 = vmatprep.subr.mxu0 0.0
      %728 = vmatpush1.msra.mxu0 0.0
      %729 = vmatprep.subr.mxu0 0.0
      %730 = vmatpush1.msra.mxu0 0.0
      %731 = vmatprep.subr.mxu0 0.0
      %732 = vmatpush1.msra.mxu0 0.0
      %733 = vmatprep.subr.mxu0 0.0
      %734 = vmatpush1.msra.mxu0 0.0
      %735 = vmatprep.subr.mxu0 0.0
      %736 = vmatpush1.msra.mxu0 0.0
      %737 = vmatprep.subr.mxu0 0.0
      %738 = vmatpush1.msra.mxu0 %v662
      %739 = vmatprep.subr.mxu0 0.0
      %740 = vmatpush1.msra.mxu0 %v661
      %741 = vmatprep.subr.mxu0 0.0
      %742 = vmatpush1.msra.mxu0 %v660
      %743 = vmatprep.subr.mxu0 0.0
      %744 = vmatpush2.msra.mxu0 0.0
      %745 = vmatprep.subr.mxu0 0.0
      %746 = vmatpush2.msra.mxu0 0.0
      %747 = vmatprep.subr.mxu0 0.0
      %748 = vmatpush2.msra.mxu0 0.0
      %749 = vmatprep.subr.mxu0 0.0
      %750 = vmatpush2.msra.mxu0 0.0
      %751 = vmatprep.subr.mxu0 0.0
      %752 = vmatpush2.msra.mxu0 0.0
      %753 = vmatprep.subr.mxu0 0.0
      %754 = vmatpush2.msra.mxu0 0.0
      %755 = vmatprep.subr.mxu0 0.0
      %756 = vmatpush2.msra.mxu0 0.0
      %757 = vmatprep.subr.mxu0 0.0
      %758 = vmatpush2.msra.mxu0 0.0
      %759 = vmatprep.subr.mxu0 0.0
      %760 = vmatpush2.msra.mxu0 0.0
      %761 = vmatprep.subr.mxu0 0.0
      %762 = vmatpush2.msra.mxu0 0.0
      %763 = vmatprep.subr.mxu0 0.0
      %764 = vmatpush2.msra.mxu0 0.0
      %765 = vmatprep.subr.mxu0 0.0
      %766 = vmatpush2.msra.mxu0 0.0
      %767 = vmatprep.subr.mxu0 0.0
      %768 = vmatpush2.msra.mxu0 0.0
      %769 = vmatprep.subr.mxu0 0.0
      %770 = vmatpush2.msra.mxu0 0.0
      %771 = vmatprep.subr.mxu0 0.0
      %772 = vmatpush2.msra.mxu0 0.0
      %773 = vmatprep.subr.mxu0 0.0
      %774 = vmatpush2.msra.mxu0 0.0
      %775 = vmatprep.mubr.f32.mxu0 0.0
      %776 = vmatmul.mubr.f32.gmra.mxu0 %v664
      %v777 = vpop.f32.mrf.mxu0
      %v778 = vadd.f32 0.0, %v777
      %v779 = vpop.f32.mrf.mxu0
      %780 = vmatprep.mubr.f32.mxu0 0.0
      %781 = vmatmul.mubr.f32.gmra.mxu0 %v667
      %v782 = vpop.f32.mrf.mxu0
      %v783 = vadd.f32 0.0, %v782
      %v784 = vpop.f32.mrf.mxu0
      %785 = vmatprep.mubr.f32.mxu0 0.0
      %786 = vmatmul.mubr.f32.gmra.mxu0 %v670
      %v787 = vpop.f32.mrf.mxu0
      %v788 = vadd.f32 0.0, %v787
      %v789 = vpop.f32.mrf.mxu0
      %790 = vmatprep.mubr.f32.mxu0 0.0
      %791 = vmatmul.mubr.f32.gmra.mxu0 %v673
      %v792 = vpop.f32.mrf.mxu0
      %v793 = vadd.f32 0.0, %v792
      %v794 = vpop.f32.mrf.mxu0
      %795 = vmatprep.mubr.f32.mxu0 0.0
      %796 = vmatmul.mubr.f32.gmra.mxu0 %v676
      %v797 = vpop.f32.mrf.mxu0
      %v798 = vadd.f32 0.0, %v797
      %v799 = vpop.f32.mrf.mxu0
      %800 = vmatprep.mubr.f32.mxu0 0.0
      %801 = vmatmul.mubr.f32.gmra.mxu0 %v679
      %v802 = vpop.f32.mrf.mxu0
      %v803 = vadd.f32 0.0, %v802
      %v804 = vpop.f32.mrf.mxu0
      %805 = vmatprep.mubr.f32.mxu0 0.0
      %806 = vmatmul.mubr.f32.gmra.mxu0 %v682
      %v807 = vpop.f32.mrf.mxu0
      %v808 = vadd.f32 0.0, %v807
      %v809 = vpop.f32.mrf.mxu0
      %810 = vmatprep.mubr.f32.mxu0 0.0
      %811 = vmatmul.mubr.f32.gmra.mxu0 %v685
      %v812 = vpop.f32.mrf.mxu0
      %v813 = vadd.f32 0.0, %v812
      %v814 = vpop.f32.mrf.mxu0
      %815 = vmatprep.mubr.f32.mxu0 0.0
      %816 = vmatmul.mubr.f32.gmra.mxu0 %v688
      %v817 = vpop.f32.mrf.mxu0
      %v818 = vadd.f32 0.0, %v817
      %v819 = vpop.f32.mrf.mxu0
      %820 = vmatprep.mubr.f32.mxu0 0.0
      %821 = vmatmul.mubr.f32.gmra.mxu0 %v691
      %v822 = vpop.f32.mrf.mxu0
      %v823 = vadd.f32 0.0, %v822
      %v824 = vpop.f32.mrf.mxu0
      %825 = vmatprep.mubr.f32.mxu0 0.0
      %826 = vmatmul.mubr.f32.gmra.mxu0 %v694
      %v827 = vpop.f32.mrf.mxu0
      %v828 = vadd.f32 0.0, %v827
      %v829 = vpop.f32.mrf.mxu0
      %830 = vmatprep.mubr.f32.mxu0 0.0
      %831 = vmatmul.mubr.f32.gmra.mxu0 %v697
      %v832 = vpop.f32.mrf.mxu0
      %v833 = vadd.f32 0.0, %v832
      %v834 = vpop.f32.mrf.mxu0
      %835 = vmatprep.mubr.f32.mxu0 0.0
      %836 = vmatmul.mubr.f32.gmra.mxu0 %v700
      %v837 = vpop.f32.mrf.mxu0
      %v838 = vadd.f32 0.0, %v837
      %v839 = vpop.f32.mrf.mxu0
      %840 = vmatprep.mubr.f32.mxu0 0.0
      %841 = vmatmul.mubr.f32.gmra.mxu0 %v703
      %v842 = vpop.f32.mrf.mxu0
      %v843 = vadd.f32 0.0, %v842
      %v844 = vpop.f32.mrf.mxu0
      %845 = vmatprep.mubr.f32.mxu0 0.0
      %846 = vmatmul.mubr.f32.gmra.mxu0 %v706
      %v847 = vpop.f32.mrf.mxu0
      %v848 = vadd.f32 0.0, %v847
      %v849 = vpop.f32.mrf.mxu0
      %850 = vmatprep.mubr.f32.mxu0 0.0
      %851 = vmatmul.mubr.f32.gmra.mxu0 %v709
      %v852 = vpop.f32.mrf.mxu0
      %v853 = vadd.f32 0.0, %v852
      %v854 = vpop.f32.mrf.mxu0
      %855 = vdwg.mxu0
      %v856 = vadd.f32 %v564, %v778
      %v857 = vadd.f32 %v569, %v783
      %v858 = vadd.f32 %v574, %v788
      %v859 = vadd.f32 %v579, %v793
      %v860 = vadd.f32 %v584, %v798
      %v861 = vadd.f32 %v589, %v803
      %v862 = vadd.f32 %v594, %v808
      %v863 = vadd.f32 %v599, %v813
      %v864 = vadd.f32 %v604, %v818
      %v865 = vadd.f32 %v609, %v823
      %v866 = vadd.f32 %v614, %v828
      %v867 = vadd.f32 %v619, %v833
      %v868 = vadd.f32 %v624, %v838
      %v869 = vadd.f32 %v629, %v843
      %v870 = vadd.f32 %v634, %v848
      %v871 = vadd.f32 %v639, %v853
      %872 = vst [vmem:[%s208] sm:$0xff] %v856
      %873 = vst [vmem:[%s208 + $0x8] sm:$0xff] %v857
      %874 = vst [vmem:[%s208 + $0x10] sm:$0xff] %v858
      %875 = vst [vmem:[%s208 + $0x18] sm:$0xff] %v859
      %876 = vst [vmem:[%s208 + $0x20] sm:$0xff] %v860
      %877 = vst [vmem:[%s208 + $0x28] sm:$0xff] %v861
      %878 = vst [vmem:[%s208 + $0x30] sm:$0xff] %v862
      %879 = vst [vmem:[%s208 + $0x38] sm:$0xff] %v863
      %880 = vst [vmem:[%s208 + $0x40] sm:$0xff] %v864
      %881 = vst [vmem:[%s208 + $0x48] sm:$0xff] %v865
      %882 = vst [vmem:[%s208 + $0x50] sm:$0xff] %v866
      %883 = vst [vmem:[%s208 + $0x58] sm:$0xff] %v867
      %884 = vst [vmem:[%s208 + $0x60] sm:$0xff] %v868
      %885 = vst [vmem:[%s208 + $0x68] sm:$0xff] %v869
      %886 = vst [vmem:[%s208 + $0x70] sm:$0xff] %v870
      %887 = vst [vmem:[%s208 + $0x78] sm:$0xff] %v871
      %v888 = vadd.f32 %v856, %v857
      %v889 = vadd.f32 %v888, %v858
      %v890 = vadd.f32 %v889, %v859
      %v891 = vadd.f32 %v890, %v860
      %v892 = vadd.f32 %v891, %v861
      %v893 = vadd.f32 %v892, %v862
      %v894 = vadd.f32 %v893, %v863
      %v895 = vadd.f32 %v894, %v864
      %v896 = vadd.f32 %v895, %v865
      %v897 = vadd.f32 %v896, %v866
      %v898 = vadd.f32 %v897, %v867
      %v899 = vadd.f32 %v898, %v868
      %v900 = vadd.f32 %v899, %v869
      %v901 = vadd.f32 %v900, %v870
      %v902 = vadd.f32 %v901, %v871
      %v903 = vrot.slane %v902, 4
      %v904 = vadd.f32 %v902, %v903
      %v905 = vrot.slane %v904, 2
      %v906 = vadd.f32 %v904, %v905
      %v907 = vrot.slane %v906, 1
      %v908 = vadd.f32 %v906, %v907
      %909 = vst [vmem:[%s211] sm:$0x1] %v908
      %v910 = vmul.f32 %v856, %v856
      %v911 = vmul.f32 %v857, %v857
      %v912 = vmul.f32 %v858, %v858
      %v913 = vmul.f32 %v859, %v859
      %v914 = vmul.f32 %v860, %v860
      %v915 = vmul.f32 %v861, %v861
      %v916 = vmul.f32 %v862, %v862
      %v917 = vmul.f32 %v863, %v863
      %v918 = vmul.f32 %v864, %v864
      %v919 = vmul.f32 %v865, %v865
      %v920 = vmul.f32 %v866, %v866
      %v921 = vmul.f32 %v867, %v867
      %v922 = vmul.f32 %v868, %v868
      %v923 = vmul.f32 %v869, %v869
      %v924 = vmul.f32 %v870, %v870
      %v925 = vmul.f32 %v871, %v871
      %v926 = vadd.f32 %v910, %v911
      %v927 = vadd.f32 %v926, %v912
      %v928 = vadd.f32 %v927, %v913
      %v929 = vadd.f32 %v928, %v914
      %v930 = vadd.f32 %v929, %v915
      %v931 = vadd.f32 %v930, %v916
      %v932 = vadd.f32 %v931, %v917
      %v933 = vadd.f32 %v932, %v918
      %v934 = vadd.f32 %v933, %v919
      %v935 = vadd.f32 %v934, %v920
      %v936 = vadd.f32 %v935, %v921
      %v937 = vadd.f32 %v936, %v922
      %v938 = vadd.f32 %v937, %v923
      %v939 = vadd.f32 %v938, %v924
      %v940 = vadd.f32 %v939, %v925
      %v941 = vrot.slane %v940, 4
      %v942 = vadd.f32 %v940, %v941
      %v943 = vrot.slane %v942, 2
      %v944 = vadd.f32 %v942, %v943
      %v945 = vrot.slane %v944, 1
      %v946 = vadd.f32 %v944, %v945
      %947 = vst [vmem:[%s214] sm:$0x1] %v946
      %p948 = scmp.lt.s32.totalorder %s16, 3
      %s949 = scalar_select %p948, %s16, 3
      %s950 = smul.addr %s949, 16
      %s951 = smul.addr %s950, 8
      %s952 = scalar_lea.vmem %s2, %s951
      %p953 = scmp.lt.s32.totalorder %s16, 3
      %s954 = scalar_select %p953, %s16, 3
      %s955 = scalar_lea.vmem %s3, %s954
      %p956 = scmp.lt.s32.totalorder %s16, 3
      %s957 = scalar_select %p956, %s16, 3
      %s958 = scalar_lea.vmem %s4, %s957
      // Predicated region
      $region29: #{double_conv.6} parent=27 // pred_check
        %p959 = pneg %p81
      $region30: #{double_conv.6} parent=27 // pred_check_branch
        %961 = sbr.rel (%p959) target = $region32
      $region31: #{double_conv.6} parent=27 // pred_region
        _
      $region32: #{double_conv.6} parent=27 // pred_fallthru
        _
      // Predicated region
      $region33: #{double_conv.6} parent=27 // pred_check
        %p962 = pneg %p107
      $region34: #{double_conv.6} parent=27 // pred_check_branch
        %964 = sbr.rel (%p962) target = $region36
      $region35: #{double_conv.6} parent=27 // pred_region
        _
      $region36: #{double_conv.6} parent=27 // pred_fallthru
        _
      // Predicated region
      $region37: #{double_conv.6} parent=27 // pred_check
        %p965 = pneg %p133
      $region38: #{double_conv.6} parent=27 // pred_check_branch
        %967 = sbr.rel (%p965) target = $region40
      $region39: #{double_conv.6} parent=27 // pred_region
        _
      $region40: #{double_conv.6} parent=27 // pred_fallthru
        _
    $region28: #{double_conv.6} parent=5 // pred_fallthru
      _
    %p968 = scmp.le.s32.totalorder 2, %s11
    // Predicated region
    $region41: #{double_conv.6} parent=5 // pred_check
      %p969 = pneg %p968
    $region42: #{double_conv.6} parent=5 // pred_check_branch
      %971 = sbr.rel (%p969) target = $region44
    $region43: #{double_conv.6} parent=5 // pred_region
      %s972 = ssub.s32 %s11, 2
      // Predicated region
      $region45: #{double_conv.6} parent=43 // pred_check
        %p973 = pneg %p87
      $region46: #{double_conv.6} parent=43 // pred_check_branch
        %975 = sbr.rel (%p973) target = $region48
      $region47: #{double_conv.6} parent=43 // pred_region
        %p976 = scmp.lt.s32.totalorder %s17, 3
        %s977 = scalar_select %p976, %s17, 3
        %s978 = smul.addr %s977, 16
        %s979 = smul.addr %s978, 8
        %s980 = scalar_lea.vmem %s2, %s979
      $region48: #{double_conv.6} parent=43 // pred_fallthru
        _
      // Predicated region
      $region49: #{double_conv.6} parent=43 // pred_check
        %p981 = pneg %p113
      $region50: #{double_conv.6} parent=43 // pred_check_branch
        %983 = sbr.rel (%p981) target = $region52
      $region51: #{double_conv.6} parent=43 // pred_region
        %p984 = scmp.lt.s32.totalorder %s17, 3
        %s985 = scalar_select %p984, %s17, 3
        %s986 = scalar_lea.vmem %s3, %s985
      $region52: #{double_conv.6} parent=43 // pred_fallthru
        _
      // Predicated region
      $region53: #{double_conv.6} parent=43 // pred_check
        %p987 = pneg %p139
      $region54: #{double_conv.6} parent=43 // pred_check_branch
        %989 = sbr.rel (%p987) target = $region56
      $region55: #{double_conv.6} parent=43 // pred_region
        %p990 = scmp.lt.s32.totalorder %s17, 3
        %s991 = scalar_select %p990, %s17, 3
        %s992 = scalar_lea.vmem %s4, %s991
      $region56: #{double_conv.6} parent=43 // pred_fallthru
        _
    $region44: #{double_conv.6} parent=5 // pred_fallthru
      _
  $region6: #{double_conv.6} parent=0 // loop_footer
    %s15 = sadd.s32 1, %s11
  $region7: #{double_conv.6} parent=0 // loop_footer_branch
    %10 = sbr.rel target = $region3
  $region8: #{double_conv.6} parent=0 // loop_exit
    _

</llo_original>
